<compile_context>
chip_gen: v7x
topology: tpu7x:2x2x1
jax: 0.10.0
libtpu: 0.0.40
codegen_flags: <defaults>
</compile_context>

<pallas_src>
import jax
import jax.numpy as jnp
from jax.experimental import pallas as pl
from jax.experimental.pallas import tpu as pltpu

# -------- small config (scaled down from the module defaults) -------------
B = 2                  # batch
C, H, W = 3, 16, 16    # image (NCHW)
SEQ = 8                # text sequence length
VOCAB = 64             # toy vocabulary for the synthetic text encoder
IMG_FEAT = 64          # image_feature_dim (determined by the image encoder)
TXT_FEAT = 32          # text_feature_dim   (768 in the paper, scaled down)
MLP_DIM = 128          # mlp_dim            (4096 in the paper, scaled down)
EMBED = 32             # embed_dim          (256 in the paper, scaled down)
BN_EPS = 1e-5

FLAT = C * H * W       # 768
PSLOT = 128            # lane-aligned slot width for the packed-param slab

# packed-parameter slab layout: (name, width) per 128-lane slot
_PACK_LAYOUT = (
    ("b_img_enc", IMG_FEAT),
    ("vm_b1", MLP_DIM), ("vm_g1", MLP_DIM), ("vm_be1", MLP_DIM),
    ("vm_b2", MLP_DIM), ("vm_g2", MLP_DIM), ("vm_be2", MLP_DIM),
    ("vm_b3", EMBED), ("clip_bi", EMBED), ("clip_bt", EMBED),
    ("logit_scale", 1),
)
PACK_WIDTH = PSLOT * len(_PACK_LAYOUT)


def _full_spec(shape):
    """BlockSpec covering the whole (small) array, grid=(1,)."""
    return pl.BlockSpec(shape, lambda i, _n=len(shape): (0,) * _n)


# --------------------------- fused Pallas kernel ---------------------------
def _slip_fused_kernel(xs_ref, wenc_ref, emb_ref, mask_ref,
                       w1_ref, w2_ref, w3_ref, wi_ref, wt_ref, pk_ref,
                       slab_ref, logits_ref):
    def seg(slot, n):                       # lane-aligned packed-param slice
        return pk_ref[:, slot * PSLOT: slot * PSLOT + n]      # (1, n)

    b_enc = seg(0, IMG_FEAT)
    b1, g1, be1 = seg(1, MLP_DIM), seg(2, MLP_DIM), seg(3, MLP_DIM)
    b2, g2, be2 = seg(4, MLP_DIM), seg(5, MLP_DIM), seg(6, MLP_DIM)
    b3 = seg(7, EMBED)
    bi = seg(8, EMBED)
    bt = seg(9, EMBED)
    logit_scale = seg(10, 1)[0, 0]

    # ---- image encoder: one stacked GEMM for (view1, view2, image) --------
    feats = jnp.dot(xs_ref[...], wenc_ref[...],
                    preferred_element_type=jnp.float32) + b_enc   # (3B, F)
    feat1 = feats[0:B]
    feat2 = feats[B:2 * B]
    feat_img = feats[2 * B:3 * B]

    # ---- vision MLP: Linear -> BN(train, biased var) -> ReLU x2 -> Linear -
    # Per-view BatchNorm statistics (matches calling vision_mlp per view).
    def bn_relu(h, g, be):
        mean = jnp.mean(h, axis=0, keepdims=True)
        var = jnp.mean((h - mean) ** 2, axis=0, keepdims=True)
        h = (h - mean) * jax.lax.rsqrt(var + BN_EPS) * g + be
        return jnp.maximum(h, 0.0)

    def vision_mlp(h):
        h = jnp.dot(h, w1_ref[...], preferred_element_type=jnp.float32) + b1
        h = bn_relu(h, g1, be1)
        h = jnp.dot(h, w2_ref[...], preferred_element_type=jnp.float32) + b2
        h = bn_relu(h, g2, be2)
        return jnp.dot(h, w3_ref[...], preferred_element_type=jnp.float32) + b3

    aug1 = vision_mlp(feat1)                # (B, EMBED)
    aug2 = vision_mlp(feat2)                # (B, EMBED)

    # ---- text encoder tail: masked mean pool over the sequence ------------
    emb = emb_ref[...]                      # (B, S, D)
    mask = mask_ref[...]                    # (B, S)
    msum = jnp.sum(emb * mask[:, :, None], axis=1)            # (B, D)
    cnt = jnp.sum(mask, axis=1, keepdims=True)                 # (B, 1)
    txt_feat = msum / jnp.maximum(cnt, 1.0)

    # ---- CLIP head: project, normalize, logits -----------------------------
    ie = jnp.dot(feat_img, wi_ref[...],
                 preferred_element_type=jnp.float32) + bi      # (B, EMBED)
    te = jnp.dot(txt_feat, wt_ref[...],
                 preferred_element_type=jnp.float32) + bt      # (B, EMBED)
    # F.normalize semantics: x / max(||x||_2, eps)
    ie = ie / jnp.maximum(jnp.sqrt(jnp.sum(ie * ie, axis=-1, keepdims=True)),
                          1e-12)
    te = te / jnp.maximum(jnp.sqrt(jnp.sum(te * te, axis=-1, keepdims=True)),
                          1e-12)
    logits = jnp.exp(logit_scale) * jax.lax.dot_general(
        ie, te, (((1,), (1,)), ((), ())),
        preferred_element_type=jnp.float32)                    # (B, B)

    # lane-dense single store of all embeddings: (B, 4*EMBED) = (2, 128)
    slab_ref[...] = jnp.concatenate([aug1, aug2, ie, te], axis=-1)
    logits_ref[...] = logits


def _pack_params(p):
    """Pack all small 1-D params / scalars into one lane-aligned (1, P) slab."""
    packed = jnp.zeros((1, PACK_WIDTH), jnp.float32)
    for i, (name, n) in enumerate(_PACK_LAYOUT):
        v = jnp.reshape(p[name], (-1,)).astype(jnp.float32)[:n]
        packed = packed.at[0, i * PSLOT: i * PSLOT + n].set(v)
    return packed


def _slip_fused(xs, emb, mask, params, packed):
    args = (
        xs, params["w_img_enc"], emb, mask,
        params["vm_w1"], params["vm_w2"], params["vm_w3"],
        params["clip_wi"], params["clip_wt"], packed,
    )
    in_specs = [_full_spec(a.shape) for a in args]
    out_shapes = (
        jax.ShapeDtypeStruct((B, 4 * EMBED), jnp.float32),   # aug1|aug2|ie|te
        jax.ShapeDtypeStruct((B, B), jnp.float32),           # logits_per_image
    )
    out_specs = (_full_spec((B, 4 * EMBED)), _full_spec((B, B)))
    return pl.pallas_call(
        _slip_fused_kernel,
        grid=(1,),
        in_specs=in_specs,
        out_specs=out_specs,
        out_shape=out_shapes,
    )(*args)


# ------------------------------ parameters --------------------------------
def init_params(key):
    def nrm(k, shape, scale=0.02):
        return (scale * jax.random.normal(k, shape)).astype(jnp.float32)

    ks = jax.random.split(key, 12)
    return {
        # image encoder: flatten -> linear
        "w_img_enc": nrm(ks[0], (FLAT, IMG_FEAT)),
        "b_img_enc": jnp.zeros((IMG_FEAT,), jnp.float32),
        # text encoder: token embedding (pooled with attention mask)
        "tok_emb": nrm(ks[1], (VOCAB, TXT_FEAT)),
        # vision_mlp (Linear/BN/ReLU x2 + Linear)
        "vm_w1": nrm(ks[2], (IMG_FEAT, MLP_DIM)),
        "vm_b1": jnp.zeros((MLP_DIM,), jnp.float32),
        "vm_g1": jnp.ones((MLP_DIM,), jnp.float32),
        "vm_be1": jnp.zeros((MLP_DIM,), jnp.float32),
        "vm_w2": nrm(ks[3], (MLP_DIM, MLP_DIM)),
        "vm_b2": jnp.zeros((MLP_DIM,), jnp.float32),
        "vm_g2": jnp.ones((MLP_DIM,), jnp.float32),
        "vm_be2": jnp.zeros((MLP_DIM,), jnp.float32),
        "vm_w3": nrm(ks[4], (MLP_DIM, EMBED)),
        "vm_b3": jnp.zeros((EMBED,), jnp.float32),
        # CLIP projection heads + logit scale
        "clip_wi": nrm(ks[5], (IMG_FEAT, EMBED)),
        "clip_bi": jnp.zeros((EMBED,), jnp.float32),
        "clip_wt": nrm(ks[6], (TXT_FEAT, EMBED)),
        "clip_bt": jnp.zeros((EMBED,), jnp.float32),
        "logit_scale": jnp.array(jnp.log(1.0 / 0.07), jnp.float32),
    }


# ------------------------------ forward -----------------------------------
def slip_forward(params, image, input_ids, attention_mask):
    # SimCLRViewTransform: two views of the image.
    # TODO(synk): stochastic random-resized-crop / color-jitter / blur have no
    # deterministic Pallas equivalent; view1 = identity, view2 = horizontal flip.
    view1 = image
    view2 = image[:, :, :, ::-1]

    # NCHW flatten (row-major, identical to torch x.reshape(B, -1)), and stack
    # (view1, view2, image) so the image encoder is a single GEMM in-kernel.
    xs = jnp.concatenate(
        [view1.reshape(B, -1), view2.reshape(B, -1), image.reshape(B, -1)],
        axis=0)                                               # (3B, FLAT)

    # text encoder front-end: embedding gather (glue); pooling happens in-kernel
    emb = params["tok_emb"][input_ids]                        # (B, S, TXT_FEAT)
    mask = attention_mask.astype(jnp.float32)                 # (B, S)

    packed = _pack_params(params)                             # (1, 11*128)

    slab, logits_per_image = _slip_fused(xs, emb, mask, params, packed)

    aug1_embed = slab[:, 0:EMBED]
    aug2_embed = slab[:, EMBED:2 * EMBED]
    image_embed = slab[:, 2 * EMBED:3 * EMBED]
    text_embed = slab[:, 3 * EMBED:4 * EMBED]

    clip_output = {
        "image_embed": image_embed,
        "text_embed": text_embed,
        "logits_per_image": logits_per_image,
        "logits_per_text": logits_per_image.T,
    }
    return {
        "aug1_embed": aug1_embed,
        "aug2_embed": aug2_embed,
        "clip_output": clip_output,
    }


if __name__ == "__main__":
    key = jax.random.PRNGKey(0)
    kp, ki, kt = jax.random.split(key, 3)

    params = init_params(kp)
    image = jax.random.normal(ki, (B, C, H, W), jnp.float32)
    input_ids = jax.random.randint(kt, (B, SEQ), 0, VOCAB, jnp.int32)
    attention_mask = jnp.concatenate(
        [jnp.ones((B, SEQ - 2), jnp.int32), jnp.zeros((B, 2), jnp.int32)],
        axis=1)

    out = jax.jit(slip_forward)(params, image, input_ids, attention_mask)
    jax.block_until_ready(out)

    assert out["aug1_embed"].shape == (B, EMBED)
    assert out["aug2_embed"].shape == (B, EMBED)
    assert out["clip_output"]["image_embed"].shape == (B, EMBED)
    assert out["clip_output"]["text_embed"].shape == (B, EMBED)
    assert out["clip_output"]["logits_per_image"].shape == (B, B)
    assert out["clip_output"]["logits_per_text"].shape == (B, B)
    assert all(jnp.all(jnp.isfinite(v)) for v in
               (out["aug1_embed"], out["aug2_embed"],
                out["clip_output"]["image_embed"],
                out["clip_output"]["text_embed"],
                out["clip_output"]["logits_per_image"]))
    print("KERNEL_OK")
</pallas_src>

<mosaic_0001>
module attributes {stable_mosaic.version = 11 : i64} {
  func.func @_slip_fused_kernel(%arg0: i32, %arg1: memref<6x768xf32, #tpu.memory_space<vmem>>, %arg2: memref<768x64xf32, #tpu.memory_space<vmem>>, %arg3: memref<2x8x32xf32, #tpu.memory_space<vmem>>, %arg4: memref<2x8xf32, #tpu.memory_space<vmem>>, %arg5: memref<64x128xf32, #tpu.memory_space<vmem>>, %arg6: memref<128x128xf32, #tpu.memory_space<vmem>>, %arg7: memref<128x32xf32, #tpu.memory_space<vmem>>, %arg8: memref<64x32xf32, #tpu.memory_space<vmem>>, %arg9: memref<32x32xf32, #tpu.memory_space<vmem>>, %arg10: memref<1x1408xf32, #tpu.memory_space<vmem>>, %arg11: memref<2x128xf32, #tpu.memory_space<vmem>>, %arg12: memref<2x2xf32, #tpu.memory_space<vmem>>) attributes {dimension_semantics = [#tpu.dimension_semantics<arbitrary>], iteration_bounds = array<i64: 1>, scalar_prefetch = 0 : i64, scratch_operands = 0 : i64, tpu.core_type = #tpu.core_type<tc>, window_params = [{pipeline_mode = #tpu.pipeline_mode<synchronous>, transform_indices = @transform_0, window_bounds = array<i64: 6, 768>}, {pipeline_mode = #tpu.pipeline_mode<synchronous>, transform_indices = @transform_1, window_bounds = array<i64: 768, 64>}, {pipeline_mode = #tpu.pipeline_mode<synchronous>, transform_indices = @transform_2, window_bounds = array<i64: 2, 8, 32>}, {pipeline_mode = #tpu.pipeline_mode<synchronous>, transform_indices = @transform_3, window_bounds = array<i64: 2, 8>}, {pipeline_mode = #tpu.pipeline_mode<synchronous>, transform_indices = @transform_4, window_bounds = array<i64: 64, 128>}, {pipeline_mode = #tpu.pipeline_mode<synchronous>, transform_indices = @transform_5, window_bounds = array<i64: 128, 128>}, {pipeline_mode = #tpu.pipeline_mode<synchronous>, transform_indices = @transform_6, window_bounds = array<i64: 128, 32>}, {pipeline_mode = #tpu.pipeline_mode<synchronous>, transform_indices = @transform_7, window_bounds = array<i64: 64, 32>}, {pipeline_mode = #tpu.pipeline_mode<synchronous>, transform_indices = @transform_8, window_bounds = array<i64: 32, 32>}, {pipeline_mode = #tpu.pipeline_mode<synchronous>, transform_indices = @transform_9, window_bounds = array<i64: 1, 1408>}, {pipeline_mode = #tpu.pipeline_mode<synchronous>, transform_indices = @transform_10, window_bounds = array<i64: 2, 128>}, {pipeline_mode = #tpu.pipeline_mode<synchronous>, transform_indices = @transform_11, window_bounds = array<i64: 2, 2>}]} {
    %c0 = arith.constant 0 : index
    %c0_0 = arith.constant 0 : index
    %0 = vector.load %arg10[%c0, %c0_0] : memref<1x1408xf32, #tpu.memory_space<vmem>>, vector<1x64xf32>
    %c0_1 = arith.constant 0 : index
    %c128 = arith.constant 128 : index
    %1 = vector.load %arg10[%c0_1, %c128] : memref<1x1408xf32, #tpu.memory_space<vmem>>, vector<1x128xf32>
    %c0_2 = arith.constant 0 : index
    %c256 = arith.constant 256 : index
    %2 = vector.load %arg10[%c0_2, %c256] : memref<1x1408xf32, #tpu.memory_space<vmem>>, vector<1x128xf32>
    %c0_3 = arith.constant 0 : index
    %c384 = arith.constant 384 : index
    %3 = vector.load %arg10[%c0_3, %c384] : memref<1x1408xf32, #tpu.memory_space<vmem>>, vector<1x128xf32>
    %c0_4 = arith.constant 0 : index
    %c512 = arith.constant 512 : index
    %4 = vector.load %arg10[%c0_4, %c512] : memref<1x1408xf32, #tpu.memory_space<vmem>>, vector<1x128xf32>
    %c0_5 = arith.constant 0 : index
    %c640 = arith.constant 640 : index
    %5 = vector.load %arg10[%c0_5, %c640] : memref<1x1408xf32, #tpu.memory_space<vmem>>, vector<1x128xf32>
    %c0_6 = arith.constant 0 : index
    %c768 = arith.constant 768 : index
    %6 = vector.load %arg10[%c0_6, %c768] : memref<1x1408xf32, #tpu.memory_space<vmem>>, vector<1x128xf32>
    %c0_7 = arith.constant 0 : index
    %c896 = arith.constant 896 : index
    %7 = vector.load %arg10[%c0_7, %c896] : memref<1x1408xf32, #tpu.memory_space<vmem>>, vector<1x32xf32>
    %c0_8 = arith.constant 0 : index
    %c1024 = arith.constant 1024 : index
    %8 = vector.load %arg10[%c0_8, %c1024] : memref<1x1408xf32, #tpu.memory_space<vmem>>, vector<1x32xf32>
    %c0_9 = arith.constant 0 : index
    %c1152 = arith.constant 1152 : index
    %9 = vector.load %arg10[%c0_9, %c1152] : memref<1x1408xf32, #tpu.memory_space<vmem>>, vector<1x32xf32>
    %c0_10 = arith.constant 0 : index
    %c1280 = arith.constant 1280 : index
    %10 = vector.load %arg10[%c0_10, %c1280] : memref<1x1408xf32, #tpu.memory_space<vmem>>, vector<1x1xf32>
    %11 = vector.extract %10[0, 0] : f32 from vector<1x1xf32>
    %c0_11 = arith.constant 0 : index
    %c0_12 = arith.constant 0 : index
    %12 = vector.load %arg1[%c0_11, %c0_12] : memref<6x768xf32, #tpu.memory_space<vmem>>, vector<6x768xf32>
    %c0_13 = arith.constant 0 : index
    %c0_14 = arith.constant 0 : index
    %13 = vector.load %arg2[%c0_13, %c0_14] : memref<768x64xf32, #tpu.memory_space<vmem>>, vector<768x64xf32>
    %cst = arith.constant dense<0.000000e+00> : vector<6x64xf32>
    %14 = tpu.matmul %12, %13, %cst {dimension_numbers = #tpu.dot_dimension_numbers<[1], [0], [0], [1], [0, 0, 1, 1], [], []>} : vector<6x768xf32>, vector<768x64xf32>, vector<6x64xf32> -> vector<6x64xf32>
    %15 = vector.broadcast %0 : vector<1x64xf32> to vector<6x64xf32>
    %16 = arith.addf %14, %15 : vector<6x64xf32>
    %17 = vector.extract_strided_slice %16 {offsets = [0, 0], sizes = [2, 64], strides = [1, 1]} : vector<6x64xf32> to vector<2x64xf32>
    %18 = vector.extract_strided_slice %16 {offsets = [2, 0], sizes = [2, 64], strides = [1, 1]} : vector<6x64xf32> to vector<2x64xf32>
    %19 = vector.extract_strided_slice %16 {offsets = [4, 0], sizes = [2, 64], strides = [1, 1]} : vector<6x64xf32> to vector<2x64xf32>
    %c0_15 = arith.constant 0 : index
    %c0_16 = arith.constant 0 : index
    %20 = vector.load %arg5[%c0_15, %c0_16] : memref<64x128xf32, #tpu.memory_space<vmem>>, vector<64x128xf32>
    %cst_17 = arith.constant dense<0.000000e+00> : vector<2x128xf32>
    %21 = tpu.matmul %17, %20, %cst_17 {dimension_numbers = #tpu.dot_dimension_numbers<[1], [0], [0], [1], [0, 0, 1, 1], [], []>} : vector<2x64xf32>, vector<64x128xf32>, vector<2x128xf32> -> vector<2x128xf32>
    %22 = vector.broadcast %1 : vector<1x128xf32> to vector<2x128xf32>
    %23 = arith.addf %21, %22 : vector<2x128xf32>
    %cst_18 = arith.constant dense<0.000000e+00> : vector<128xf32>
    %24 = vector.multi_reduction <add>, %23, %cst_18 [0] : vector<2x128xf32> to vector<128xf32>
    %25 = vector.shape_cast %24 : vector<128xf32> to vector<1x128xf32>
    %cst_19 = arith.constant 2.000000e+00 : f32
    %26 = vector.broadcast %cst_19 : f32 to vector<1x128xf32>
    %27 = arith.divf %25, %26 : vector<1x128xf32>
    %28 = vector.broadcast %27 : vector<1x128xf32> to vector<2x128xf32>
    %29 = arith.subf %23, %28 : vector<2x128xf32>
    %30 = arith.mulf %29, %29 : vector<2x128xf32>
    %cst_20 = arith.constant dense<0.000000e+00> : vector<128xf32>
    %31 = vector.multi_reduction <add>, %30, %cst_20 [0] : vector<2x128xf32> to vector<128xf32>
    %32 = vector.shape_cast %31 : vector<128xf32> to vector<1x128xf32>
    %cst_21 = arith.constant 2.000000e+00 : f32
    %33 = vector.broadcast %cst_21 : f32 to vector<1x128xf32>
    %34 = arith.divf %32, %33 : vector<1x128xf32>
    %35 = vector.broadcast %27 : vector<1x128xf32> to vector<2x128xf32>
    %36 = arith.subf %23, %35 : vector<2x128xf32>
    %cst_22 = arith.constant 9.99999974E-6 : f32
    %37 = vector.broadcast %cst_22 : f32 to vector<1x128xf32>
    %38 = arith.addf %34, %37 : vector<1x128xf32>
    %39 = math.rsqrt %38 : vector<1x128xf32>
    %40 = vector.broadcast %39 : vector<1x128xf32> to vector<2x128xf32>
    %41 = arith.mulf %36, %40 : vector<2x128xf32>
    %42 = vector.broadcast %2 : vector<1x128xf32> to vector<2x128xf32>
    %43 = arith.mulf %41, %42 : vector<2x128xf32>
    %44 = vector.broadcast %3 : vector<1x128xf32> to vector<2x128xf32>
    %45 = arith.addf %43, %44 : vector<2x128xf32>
    %cst_23 = arith.constant 0.000000e+00 : f32
    %46 = vector.broadcast %cst_23 : f32 to vector<2x128xf32>
    %47 = arith.maximumf %45, %46 : vector<2x128xf32>
    %c0_24 = arith.constant 0 : index
    %c0_25 = arith.constant 0 : index
    %48 = vector.load %arg6[%c0_24, %c0_25] : memref<128x128xf32, #tpu.memory_space<vmem>>, vector<128x128xf32>
    %cst_26 = arith.constant dense<0.000000e+00> : vector<2x128xf32>
    %49 = tpu.matmul %47, %48, %cst_26 {dimension_numbers = #tpu.dot_dimension_numbers<[1], [0], [0], [1], [0, 0, 1, 1], [], []>} : vector<2x128xf32>, vector<128x128xf32>, vector<2x128xf32> -> vector<2x128xf32>
    %50 = vector.broadcast %4 : vector<1x128xf32> to vector<2x128xf32>
    %51 = arith.addf %49, %50 : vector<2x128xf32>
    %cst_27 = arith.constant dense<0.000000e+00> : vector<128xf32>
    %52 = vector.multi_reduction <add>, %51, %cst_27 [0] : vector<2x128xf32> to vector<128xf32>
    %53 = vector.shape_cast %52 : vector<128xf32> to vector<1x128xf32>
    %cst_28 = arith.constant 2.000000e+00 : f32
    %54 = vector.broadcast %cst_28 : f32 to vector<1x128xf32>
    %55 = arith.divf %53, %54 : vector<1x128xf32>
    %56 = vector.broadcast %55 : vector<1x128xf32> to vector<2x128xf32>
    %57 = arith.subf %51, %56 : vector<2x128xf32>
    %58 = arith.mulf %57, %57 : vector<2x128xf32>
    %cst_29 = arith.constant dense<0.000000e+00> : vector<128xf32>
    %59 = vector.multi_reduction <add>, %58, %cst_29 [0] : vector<2x128xf32> to vector<128xf32>
    %60 = vector.shape_cast %59 : vector<128xf32> to vector<1x128xf32>
    %cst_30 = arith.constant 2.000000e+00 : f32
    %61 = vector.broadcast %cst_30 : f32 to vector<1x128xf32>
    %62 = arith.divf %60, %61 : vector<1x128xf32>
    %63 = vector.broadcast %55 : vector<1x128xf32> to vector<2x128xf32>
    %64 = arith.subf %51, %63 : vector<2x128xf32>
    %cst_31 = arith.constant 9.99999974E-6 : f32
    %65 = vector.broadcast %cst_31 : f32 to vector<1x128xf32>
    %66 = arith.addf %62, %65 : vector<1x128xf32>
    %67 = math.rsqrt %66 : vector<1x128xf32>
    %68 = vector.broadcast %67 : vector<1x128xf32> to vector<2x128xf32>
    %69 = arith.mulf %64, %68 : vector<2x128xf32>
    %70 = vector.broadcast %5 : vector<1x128xf32> to vector<2x128xf32>
    %71 = arith.mulf %69, %70 : vector<2x128xf32>
    %72 = vector.broadcast %6 : vector<1x128xf32> to vector<2x128xf32>
    %73 = arith.addf %71, %72 : vector<2x128xf32>
    %cst_32 = arith.constant 0.000000e+00 : f32
    %74 = vector.broadcast %cst_32 : f32 to vector<2x128xf32>
    %75 = arith.maximumf %73, %74 : vector<2x128xf32>
    %c0_33 = arith.constant 0 : index
    %c0_34 = arith.constant 0 : index
    %76 = vector.load %arg7[%c0_33, %c0_34] : memref<128x32xf32, #tpu.memory_space<vmem>>, vector<128x32xf32>
    %cst_35 = arith.constant dense<0.000000e+00> : vector<2x32xf32>
    %77 = tpu.matmul %75, %76, %cst_35 {dimension_numbers = #tpu.dot_dimension_numbers<[1], [0], [0], [1], [0, 0, 1, 1], [], []>} : vector<2x128xf32>, vector<128x32xf32>, vector<2x32xf32> -> vector<2x32xf32>
    %78 = vector.broadcast %7 : vector<1x32xf32> to vector<2x32xf32>
    %79 = arith.addf %77, %78 : vector<2x32xf32>
    %c0_36 = arith.constant 0 : index
    %c0_37 = arith.constant 0 : index
    %80 = vector.load %arg5[%c0_36, %c0_37] : memref<64x128xf32, #tpu.memory_space<vmem>>, vector<64x128xf32>
    %cst_38 = arith.constant dense<0.000000e+00> : vector<2x128xf32>
    %81 = tpu.matmul %18, %80, %cst_38 {dimension_numbers = #tpu.dot_dimension_numbers<[1], [0], [0], [1], [0, 0, 1, 1], [], []>} : vector<2x64xf32>, vector<64x128xf32>, vector<2x128xf32> -> vector<2x128xf32>
    %82 = vector.broadcast %1 : vector<1x128xf32> to vector<2x128xf32>
    %83 = arith.addf %81, %82 : vector<2x128xf32>
    %cst_39 = arith.constant dense<0.000000e+00> : vector<128xf32>
    %84 = vector.multi_reduction <add>, %83, %cst_39 [0] : vector<2x128xf32> to vector<128xf32>
    %85 = vector.shape_cast %84 : vector<128xf32> to vector<1x128xf32>
    %cst_40 = arith.constant 2.000000e+00 : f32
    %86 = vector.broadcast %cst_40 : f32 to vector<1x128xf32>
    %87 = arith.divf %85, %86 : vector<1x128xf32>
    %88 = vector.broadcast %87 : vector<1x128xf32> to vector<2x128xf32>
    %89 = arith.subf %83, %88 : vector<2x128xf32>
    %90 = arith.mulf %89, %89 : vector<2x128xf32>
    %cst_41 = arith.constant dense<0.000000e+00> : vector<128xf32>
    %91 = vector.multi_reduction <add>, %90, %cst_41 [0] : vector<2x128xf32> to vector<128xf32>
    %92 = vector.shape_cast %91 : vector<128xf32> to vector<1x128xf32>
    %cst_42 = arith.constant 2.000000e+00 : f32
    %93 = vector.broadcast %cst_42 : f32 to vector<1x128xf32>
    %94 = arith.divf %92, %93 : vector<1x128xf32>
    %95 = vector.broadcast %87 : vector<1x128xf32> to vector<2x128xf32>
    %96 = arith.subf %83, %95 : vector<2x128xf32>
    %cst_43 = arith.constant 9.99999974E-6 : f32
    %97 = vector.broadcast %cst_43 : f32 to vector<1x128xf32>
    %98 = arith.addf %94, %97 : vector<1x128xf32>
    %99 = math.rsqrt %98 : vector<1x128xf32>
    %100 = vector.broadcast %99 : vector<1x128xf32> to vector<2x128xf32>
    %101 = arith.mulf %96, %100 : vector<2x128xf32>
    %102 = vector.broadcast %2 : vector<1x128xf32> to vector<2x128xf32>
    %103 = arith.mulf %101, %102 : vector<2x128xf32>
    %104 = vector.broadcast %3 : vector<1x128xf32> to vector<2x128xf32>
    %105 = arith.addf %103, %104 : vector<2x128xf32>
    %cst_44 = arith.constant 0.000000e+00 : f32
    %106 = vector.broadcast %cst_44 : f32 to vector<2x128xf32>
    %107 = arith.maximumf %105, %106 : vector<2x128xf32>
    %c0_45 = arith.constant 0 : index
    %c0_46 = arith.constant 0 : index
    %108 = vector.load %arg6[%c0_45, %c0_46] : memref<128x128xf32, #tpu.memory_space<vmem>>, vector<128x128xf32>
    %cst_47 = arith.constant dense<0.000000e+00> : vector<2x128xf32>
    %109 = tpu.matmul %107, %108, %cst_47 {dimension_numbers = #tpu.dot_dimension_numbers<[1], [0], [0], [1], [0, 0, 1, 1], [], []>} : vector<2x128xf32>, vector<128x128xf32>, vector<2x128xf32> -> vector<2x128xf32>
    %110 = vector.broadcast %4 : vector<1x128xf32> to vector<2x128xf32>
    %111 = arith.addf %109, %110 : vector<2x128xf32>
    %cst_48 = arith.constant dense<0.000000e+00> : vector<128xf32>
    %112 = vector.multi_reduction <add>, %111, %cst_48 [0] : vector<2x128xf32> to vector<128xf32>
    %113 = vector.shape_cast %112 : vector<128xf32> to vector<1x128xf32>
    %cst_49 = arith.constant 2.000000e+00 : f32
    %114 = vector.broadcast %cst_49 : f32 to vector<1x128xf32>
    %115 = arith.divf %113, %114 : vector<1x128xf32>
    %116 = vector.broadcast %115 : vector<1x128xf32> to vector<2x128xf32>
    %117 = arith.subf %111, %116 : vector<2x128xf32>
    %118 = arith.mulf %117, %117 : vector<2x128xf32>
    %cst_50 = arith.constant dense<0.000000e+00> : vector<128xf32>
    %119 = vector.multi_reduction <add>, %118, %cst_50 [0] : vector<2x128xf32> to vector<128xf32>
    %120 = vector.shape_cast %119 : vector<128xf32> to vector<1x128xf32>
    %cst_51 = arith.constant 2.000000e+00 : f32
    %121 = vector.broadcast %cst_51 : f32 to vector<1x128xf32>
    %122 = arith.divf %120, %121 : vector<1x128xf32>
    %123 = vector.broadcast %115 : vector<1x128xf32> to vector<2x128xf32>
    %124 = arith.subf %111, %123 : vector<2x128xf32>
    %cst_52 = arith.constant 9.99999974E-6 : f32
    %125 = vector.broadcast %cst_52 : f32 to vector<1x128xf32>
    %126 = arith.addf %122, %125 : vector<1x128xf32>
    %127 = math.rsqrt %126 : vector<1x128xf32>
    %128 = vector.broadcast %127 : vector<1x128xf32> to vector<2x128xf32>
    %129 = arith.mulf %124, %128 : vector<2x128xf32>
    %130 = vector.broadcast %5 : vector<1x128xf32> to vector<2x128xf32>
    %131 = arith.mulf %129, %130 : vector<2x128xf32>
    %132 = vector.broadcast %6 : vector<1x128xf32> to vector<2x128xf32>
    %133 = arith.addf %131, %132 : vector<2x128xf32>
    %cst_53 = arith.constant 0.000000e+00 : f32
    %134 = vector.broadcast %cst_53 : f32 to vector<2x128xf32>
    %135 = arith.maximumf %133, %134 : vector<2x128xf32>
    %c0_54 = arith.constant 0 : index
    %c0_55 = arith.constant 0 : index
    %136 = vector.load %arg7[%c0_54, %c0_55] : memref<128x32xf32, #tpu.memory_space<vmem>>, vector<128x32xf32>
    %cst_56 = arith.constant dense<0.000000e+00> : vector<2x32xf32>
    %137 = tpu.matmul %135, %136, %cst_56 {dimension_numbers = #tpu.dot_dimension_numbers<[1], [0], [0], [1], [0, 0, 1, 1], [], []>} : vector<2x128xf32>, vector<128x32xf32>, vector<2x32xf32> -> vector<2x32xf32>
    %138 = vector.broadcast %7 : vector<1x32xf32> to vector<2x32xf32>
    %139 = arith.addf %137, %138 : vector<2x32xf32>
    %c0_57 = arith.constant 0 : index
    %c0_58 = arith.constant 0 : index
    %c0_59 = arith.constant 0 : index
    %140 = vector.load %arg3[%c0_57, %c0_58, %c0_59] : memref<2x8x32xf32, #tpu.memory_space<vmem>>, vector<2x8x32xf32>
    %c0_60 = arith.constant 0 : index
    %c0_61 = arith.constant 0 : index
    %141 = vector.load %arg4[%c0_60, %c0_61] : memref<2x8xf32, #tpu.memory_space<vmem>>, vector<2x8xf32>
    %142 = vector.shape_cast %141 : vector<2x8xf32> to vector<2x8x1xf32>
    %143 = vector.broadcast %142 : vector<2x8x1xf32> to vector<2x8x32xf32>
    %144 = arith.mulf %140, %143 : vector<2x8x32xf32>
    %cst_62 = arith.constant dense<0.000000e+00> : vector<2x32xf32>
    %145 = vector.multi_reduction <add>, %144, %cst_62 [1] : vector<2x8x32xf32> to vector<2x32xf32>
    %cst_63 = arith.constant dense<0.000000e+00> : vector<2xf32>
    %146 = vector.multi_reduction <add>, %141, %cst_63 [1] : vector<2x8xf32> to vector<2xf32>
    %147 = vector.shape_cast %146 : vector<2xf32> to vector<2x1xf32>
    %cst_64 = arith.constant 1.000000e+00 : f32
    %148 = vector.broadcast %cst_64 : f32 to vector<2x1xf32>
    %149 = arith.maximumf %147, %148 : vector<2x1xf32>
    %150 = vector.broadcast %149 : vector<2x1xf32> to vector<2x32xf32>
    %151 = arith.divf %145, %150 : vector<2x32xf32>
    %c0_65 = arith.constant 0 : index
    %c0_66 = arith.constant 0 : index
    %152 = vector.load %arg8[%c0_65, %c0_66] : memref<64x32xf32, #tpu.memory_space<vmem>>, vector<64x32xf32>
    %cst_67 = arith.constant dense<0.000000e+00> : vector<2x32xf32>
    %153 = tpu.matmul %19, %152, %cst_67 {dimension_numbers = #tpu.dot_dimension_numbers<[1], [0], [0], [1], [0, 0, 1, 1], [], []>} : vector<2x64xf32>, vector<64x32xf32>, vector<2x32xf32> -> vector<2x32xf32>
    %154 = vector.broadcast %8 : vector<1x32xf32> to vector<2x32xf32>
    %155 = arith.addf %153, %154 : vector<2x32xf32>
    %c0_68 = arith.constant 0 : index
    %c0_69 = arith.constant 0 : index
    %156 = vector.load %arg9[%c0_68, %c0_69] : memref<32x32xf32, #tpu.memory_space<vmem>>, vector<32x32xf32>
    %cst_70 = arith.constant dense<0.000000e+00> : vector<2x32xf32>
    %157 = tpu.matmul %151, %156, %cst_70 {dimension_numbers = #tpu.dot_dimension_numbers<[1], [0], [0], [1], [0, 0, 1, 1], [], []>} : vector<2x32xf32>, vector<32x32xf32>, vector<2x32xf32> -> vector<2x32xf32>
    %158 = vector.broadcast %9 : vector<1x32xf32> to vector<2x32xf32>
    %159 = arith.addf %157, %158 : vector<2x32xf32>
    %160 = arith.mulf %155, %155 : vector<2x32xf32>
    %cst_71 = arith.constant dense<0.000000e+00> : vector<2xf32>
    %161 = vector.multi_reduction <add>, %160, %cst_71 [1] : vector<2x32xf32> to vector<2xf32>
    %162 = vector.shape_cast %161 : vector<2xf32> to vector<2x1xf32>
    %163 = math.sqrt %162 : vector<2x1xf32>
    %cst_72 = arith.constant 9.99999996E-13 : f32
    %164 = vector.broadcast %cst_72 : f32 to vector<2x1xf32>
    %165 = arith.maximumf %163, %164 : vector<2x1xf32>
    %166 = vector.broadcast %165 : vector<2x1xf32> to vector<2x32xf32>
    %167 = arith.divf %155, %166 : vector<2x32xf32>
    %168 = arith.mulf %159, %159 : vector<2x32xf32>
    %cst_73 = arith.constant dense<0.000000e+00> : vector<2xf32>
    %169 = vector.multi_reduction <add>, %168, %cst_73 [1] : vector<2x32xf32> to vector<2xf32>
    %170 = vector.shape_cast %169 : vector<2xf32> to vector<2x1xf32>
    %171 = math.sqrt %170 : vector<2x1xf32>
    %cst_74 = arith.constant 9.99999996E-13 : f32
    %172 = vector.broadcast %cst_74 : f32 to vector<2x1xf32>
    %173 = arith.maximumf %171, %172 : vector<2x1xf32>
    %174 = vector.broadcast %173 : vector<2x1xf32> to vector<2x32xf32>
    %175 = arith.divf %159, %174 : vector<2x32xf32>
    %176 = math.exp %11 : f32
    %cst_75 = arith.constant dense<0.000000e+00> : vector<2x2xf32>
    %177 = tpu.matmul %167, %175, %cst_75 {dimension_numbers = #tpu.dot_dimension_numbers<[1], [1], [0], [0], [0, 0, 1, 0], [], []>} : vector<2x32xf32>, vector<2x32xf32>, vector<2x2xf32> -> vector<2x2xf32>
    %178 = vector.broadcast %176 : f32 to vector<2x2xf32>
    %179 = arith.mulf %178, %177 : vector<2x2xf32>
    %180 = tpu.concatenate %79, %139, %167, %175 in 1 : vector<2x32xf32>, vector<2x32xf32>, vector<2x32xf32>, vector<2x32xf32> -> vector<2x128xf32>
    %c0_76 = arith.constant 0 : index
    %c0_77 = arith.constant 0 : index
    %181 = vector.load %arg11[%c0_76, %c0_77] : memref<2x128xf32, #tpu.memory_space<vmem>>, vector<2x128xf32>
    tpu.vector_store %arg11[%c0_76, %c0_77], %180 {strides = array<i32>} : memref<2x128xf32, #tpu.memory_space<vmem>>, vector<2x128xf32>,
    %c0_78 = arith.constant 0 : index
    %c0_79 = arith.constant 0 : index
    %182 = vector.load %arg12[%c0_78, %c0_79] : memref<2x2xf32, #tpu.memory_space<vmem>>, vector<2x2xf32>
    tpu.vector_store %arg12[%c0_78, %c0_79], %179 {strides = array<i32>} : memref<2x2xf32, #tpu.memory_space<vmem>>, vector<2x2xf32>,
    return
  }
  func.func @transform_0(%arg0: i32) -> (i32, i32) {
    %c0_i32 = arith.constant 0 : i32
    %c0_i32_0 = arith.constant 0 : i32
    %c0_i32_1 = arith.constant 0 : i32
    return %c0_i32, %c0_i32_0 : i32, i32
  }
  func.func @transform_1(%arg0: i32) -> (i32, i32) {
    %c0_i32 = arith.constant 0 : i32
    %c0_i32_0 = arith.constant 0 : i32
    %c0_i32_1 = arith.constant 0 : i32
    return %c0_i32, %c0_i32_0 : i32, i32
  }
  func.func @transform_2(%arg0: i32) -> (i32, i32, i32) {
    %c0_i32 = arith.constant 0 : i32
    %c0_i32_0 = arith.constant 0 : i32
    %c0_i32_1 = arith.constant 0 : i32
    %c0_i32_2 = arith.constant 0 : i32
    return %c0_i32, %c0_i32_0, %c0_i32_1 : i32, i32, i32
  }
  func.func @transform_3(%arg0: i32) -> (i32, i32) {
    %c0_i32 = arith.constant 0 : i32
    %c0_i32_0 = arith.constant 0 : i32
    %c0_i32_1 = arith.constant 0 : i32
    return %c0_i32, %c0_i32_0 : i32, i32
  }
  func.func @transform_4(%arg0: i32) -> (i32, i32) {
    %c0_i32 = arith.constant 0 : i32
    %c0_i32_0 = arith.constant 0 : i32
    %c0_i32_1 = arith.constant 0 : i32
    return %c0_i32, %c0_i32_0 : i32, i32
  }
  func.func @transform_5(%arg0: i32) -> (i32, i32) {
    %c0_i32 = arith.constant 0 : i32
    %c0_i32_0 = arith.constant 0 : i32
    %c0_i32_1 = arith.constant 0 : i32
    return %c0_i32, %c0_i32_0 : i32, i32
  }
  func.func @transform_6(%arg0: i32) -> (i32, i32) {
    %c0_i32 = arith.constant 0 : i32
    %c0_i32_0 = arith.constant 0 : i32
    %c0_i32_1 = arith.constant 0 : i32
    return %c0_i32, %c0_i32_0 : i32, i32
  }
  func.func @transform_7(%arg0: i32) -> (i32, i32) {
    %c0_i32 = arith.constant 0 : i32
    %c0_i32_0 = arith.constant 0 : i32
    %c0_i32_1 = arith.constant 0 : i32
    return %c0_i32, %c0_i32_0 : i32, i32
  }
  func.func @transform_8(%arg0: i32) -> (i32, i32) {
    %c0_i32 = arith.constant 0 : i32
    %c0_i32_0 = arith.constant 0 : i32
    %c0_i32_1 = arith.constant 0 : i32
    return %c0_i32, %c0_i32_0 : i32, i32
  }
  func.func @transform_9(%arg0: i32) -> (i32, i32) {
    %c0_i32 = arith.constant 0 : i32
    %c0_i32_0 = arith.constant 0 : i32
    %c0_i32_1 = arith.constant 0 : i32
    return %c0_i32, %c0_i32_0 : i32, i32
  }
  func.func @transform_10(%arg0: i32) -> (i32, i32) {
    %c0_i32 = arith.constant 0 : i32
    %c0_i32_0 = arith.constant 0 : i32
    %c0_i32_1 = arith.constant 0 : i32
    return %c0_i32, %c0_i32_0 : i32, i32
  }
  func.func @transform_11(%arg0: i32) -> (i32, i32) {
    %c0_i32 = arith.constant 0 : i32
    %c0_i32_0 = arith.constant 0 : i32
    %c0_i32_1 = arith.constant 0 : i32
    return %c0_i32, %c0_i32_0 : i32, i32
  }
}

</mosaic_0001>

<llo_original>
// kernel: slip_forward.1
$region0: #{slip_forward.1}
  #allocation0 [shape = 'u32[]', space=smem, size = 0x4, offset = 0x4, fixed_abs, tag = 'smem constant byte address 0x4 - core index']
  #allocation1 [shape = 'u32[144,128]{1,0:T(1,128)}', space=vmem, size = 0x12000, scoped, tag = 'internal scratch']
  %s0 = inlined_call_operand.vmem [shape: f32[6,768], index: 0, kind: input, shape index: {}]
  %s1 = inlined_call_operand.vmem [shape: f32[768,64], index: 1, kind: input, shape index: {}]
  %s2 = inlined_call_operand.vmem [shape: f32[2,8,32], index: 2, kind: input, shape index: {}]
  %s3 = inlined_call_operand.vmem [shape: f32[2,8], index: 3, kind: input, shape index: {}]
  %s4 = inlined_call_operand.vmem [shape: f32[64,128], index: 4, kind: input, shape index: {}]
  %s5 = inlined_call_operand.vmem [shape: f32[128,128], index: 5, kind: input, shape index: {}]
  %s6 = inlined_call_operand.vmem [shape: f32[128,32], index: 6, kind: input, shape index: {}]
  %s7 = inlined_call_operand.vmem [shape: f32[64,32], index: 7, kind: input, shape index: {}]
  %s8 = inlined_call_operand.vmem [shape: f32[32,32], index: 8, kind: input, shape index: {}]
  %s9 = inlined_call_operand.vmem [shape: f32[1,1408], index: 9, kind: input, shape index: {}]
  %s10 = inlined_call_operand.vmem [shape: f32[2,128], index: 10, kind: output, shape index: {0}]
  %s11 = inlined_call_operand.vmem [shape: f32[2,2], index: 11, kind: output, shape index: {1}]
  %12 = xla_tuple %s10, %s11
  %s13 = sld [smem:[#allocation0]]
  $region58: #{slip_forward.1} parent=0
    _
  %s15 = ssub.s32 1, %s13
  %s16 = scalar_select 0, %s15, %s13
  // Predicated region
  $region2: #{slip_forward.1} parent=0 // pred_check
    _
  $region3: #{slip_forward.1} parent=0 // pred_check_branch
    %18 = sbr.rel (0) target = $region5
  $region4: #{slip_forward.1} parent=0 // pred_region
    _
  $region5: #{slip_forward.1} parent=0 // pred_fallthru
    _
  // Predicated region
  $region6: #{slip_forward.1} parent=0 // pred_check
    _
  $region7: #{slip_forward.1} parent=0 // pred_check_branch
    %20 = sbr.rel (0) target = $region9
  $region8: #{slip_forward.1} parent=0 // pred_region
    _
  $region9: #{slip_forward.1} parent=0 // pred_fallthru
    _
  // Predicated region
  $region10: #{slip_forward.1} parent=0 // pred_check
    _
  $region11: #{slip_forward.1} parent=0 // pred_check_branch
    %22 = sbr.rel (0) target = $region13
  $region12: #{slip_forward.1} parent=0 // pred_region
    _
  $region13: #{slip_forward.1} parent=0 // pred_fallthru
    _
  // Predicated region
  $region14: #{slip_forward.1} parent=0 // pred_check
    _
  $region15: #{slip_forward.1} parent=0 // pred_check_branch
    %24 = sbr.rel (0) target = $region17
  $region16: #{slip_forward.1} parent=0 // pred_region
    _
  $region17: #{slip_forward.1} parent=0 // pred_fallthru
    _
  // Predicated region
  $region18: #{slip_forward.1} parent=0 // pred_check
    _
  $region19: #{slip_forward.1} parent=0 // pred_check_branch
    %26 = sbr.rel (0) target = $region21
  $region20: #{slip_forward.1} parent=0 // pred_region
    _
  $region21: #{slip_forward.1} parent=0 // pred_fallthru
    _
  // Predicated region
  $region22: #{slip_forward.1} parent=0 // pred_check
    _
  $region23: #{slip_forward.1} parent=0 // pred_check_branch
    %28 = sbr.rel (0) target = $region25
  $region24: #{slip_forward.1} parent=0 // pred_region
    _
  $region25: #{slip_forward.1} parent=0 // pred_fallthru
    _
  // Predicated region
  $region26: #{slip_forward.1} parent=0 // pred_check
    _
  $region27: #{slip_forward.1} parent=0 // pred_check_branch
    %30 = sbr.rel (0) target = $region29
  $region28: #{slip_forward.1} parent=0 // pred_region
    _
  $region29: #{slip_forward.1} parent=0 // pred_fallthru
    _
  // Predicated region
  $region30: #{slip_forward.1} parent=0 // pred_check
    _
  $region31: #{slip_forward.1} parent=0 // pred_check_branch
    %32 = sbr.rel (0) target = $region33
  $region32: #{slip_forward.1} parent=0 // pred_region
    _
  $region33: #{slip_forward.1} parent=0 // pred_fallthru
    _
  // Predicated region
  $region34: #{slip_forward.1} parent=0 // pred_check
    _
  $region35: #{slip_forward.1} parent=0 // pred_check_branch
    %34 = sbr.rel (0) target = $region37
  $region36: #{slip_forward.1} parent=0 // pred_region
    _
  $region37: #{slip_forward.1} parent=0 // pred_fallthru
    _
  // Predicated region
  $region38: #{slip_forward.1} parent=0 // pred_check
    _
  $region39: #{slip_forward.1} parent=0 // pred_check_branch
    %36 = sbr.rel (0) target = $region41
  $region40: #{slip_forward.1} parent=0 // pred_region
    _
  $region41: #{slip_forward.1} parent=0 // pred_fallthru
    _
  %v37 = vld [vmem:[%s9] sm:$0x1]
  %v38 = vld [vmem:[%s9 + $0x1] sm:$0x1]
  %v39 = vld [vmem:[%s9 + $0x2] sm:$0x1]
  %v40 = vld [vmem:[%s9 + $0x3] sm:$0x1]
  %v41 = vld [vmem:[%s9 + $0x4] sm:$0x1]
  %v42 = vld [vmem:[%s9 + $0x5] sm:$0x1]
  %v43 = vld [vmem:[%s9 + $0x6] sm:$0x1]
  %v44 = vld [vmem:[%s9 + $0x7] sm:$0x1]
  %v45 = vld [vmem:[%s9 + $0x8] sm:$0x1]
  %v46 = vld [vmem:[%s9 + $0x9] sm:$0x1]
  %v47 = vld [vmem:[%s9 + $0xa] sm:$0x1]
  %s48 = vtos %v47
  %v49 = vld [vmem:[%s0] sm:$0x3f]
  %v50 = vld [vmem:[%s0 + $0x8] sm:$0x3f]
  %v51 = vld [vmem:[%s0 + $0x10] sm:$0x3f]
  %v52 = vld [vmem:[%s0 + $0x18] sm:$0x3f]
  %v53 = vld [vmem:[%s0 + $0x20] sm:$0x3f]
  %v54 = vld [vmem:[%s0 + $0x28] sm:$0x3f]
  %v55 = vld [vmem:[%s1] sm:$0xff]
  %v56 = vld [vmem:[%s1 + $0x8] sm:$0xff]
  %v57 = vld [vmem:[%s1 + $0x10] sm:$0xff]
  %v58 = vld [vmem:[%s1 + $0x18] sm:$0xff]
  %v59 = vld [vmem:[%s1 + $0x20] sm:$0xff]
  %v60 = vld [vmem:[%s1 + $0x28] sm:$0xff]
  %v61 = vld [vmem:[%s1 + $0x30] sm:$0xff]
  %v62 = vld [vmem:[%s1 + $0x38] sm:$0xff]
  %v63 = vld [vmem:[%s1 + $0x40] sm:$0xff]
  %v64 = vld [vmem:[%s1 + $0x48] sm:$0xff]
  %v65 = vld [vmem:[%s1 + $0x50] sm:$0xff]
  %v66 = vld [vmem:[%s1 + $0x58] sm:$0xff]
  %v67 = vld [vmem:[%s1 + $0x60] sm:$0xff]
  %v68 = vld [vmem:[%s1 + $0x68] sm:$0xff]
  %v69 = vld [vmem:[%s1 + $0x70] sm:$0xff]
  %v70 = vld [vmem:[%s1 + $0x78] sm:$0xff]
  %v71 = vld [vmem:[%s1 + $0x80] sm:$0xff]
  %v72 = vld [vmem:[%s1 + $0x88] sm:$0xff]
  %v73 = vld [vmem:[%s1 + $0x90] sm:$0xff]
  %v74 = vld [vmem:[%s1 + $0x98] sm:$0xff]
  %v75 = vld [vmem:[%s1 + $0xa0] sm:$0xff]
  %v76 = vld [vmem:[%s1 + $0xa8] sm:$0xff]
  %v77 = vld [vmem:[%s1 + $0xb0] sm:$0xff]
  %v78 = vld [vmem:[%s1 + $0xb8] sm:$0xff]
  %v79 = vld [vmem:[%s1 + $0xc0] sm:$0xff]
  %v80 = vld [vmem:[%s1 + $0xc8] sm:$0xff]
  %v81 = vld [vmem:[%s1 + $0xd0] sm:$0xff]
  %v82 = vld [vmem:[%s1 + $0xd8] sm:$0xff]
  %v83 = vld [vmem:[%s1 + $0xe0] sm:$0xff]
  %v84 = vld [vmem:[%s1 + $0xe8] sm:$0xff]
  %v85 = vld [vmem:[%s1 + $0xf0] sm:$0xff]
  %v86 = vld [vmem:[%s1 + $0xf8] sm:$0xff]
  %v87 = vld [vmem:[%s1 + $0x100] sm:$0xff]
  %v88 = vld [vmem:[%s1 + $0x108] sm:$0xff]
  %v89 = vld [vmem:[%s1 + $0x110] sm:$0xff]
  %v90 = vld [vmem:[%s1 + $0x118] sm:$0xff]
  %v91 = vld [vmem:[%s1 + $0x120] sm:$0xff]
  %v92 = vld [vmem:[%s1 + $0x128] sm:$0xff]
  %v93 = vld [vmem:[%s1 + $0x130] sm:$0xff]
  %v94 = vld [vmem:[%s1 + $0x138] sm:$0xff]
  %v95 = vld [vmem:[%s1 + $0x140] sm:$0xff]
  %v96 = vld [vmem:[%s1 + $0x148] sm:$0xff]
  %v97 = vld [vmem:[%s1 + $0x150] sm:$0xff]
  %v98 = vld [vmem:[%s1 + $0x158] sm:$0xff]
  %v99 = vld [vmem:[%s1 + $0x160] sm:$0xff]
  %v100 = vld [vmem:[%s1 + $0x168] sm:$0xff]
  %v101 = vld [vmem:[%s1 + $0x170] sm:$0xff]
  %v102 = vld [vmem:[%s1 + $0x178] sm:$0xff]
  %v103 = vld [vmem:[%s1 + $0x180] sm:$0xff]
  %v104 = vld [vmem:[%s1 + $0x188] sm:$0xff]
  %v105 = vld [vmem:[%s1 + $0x190] sm:$0xff]
  %v106 = vld [vmem:[%s1 + $0x198] sm:$0xff]
  %v107 = vld [vmem:[%s1 + $0x1a0] sm:$0xff]
  %v108 = vld [vmem:[%s1 + $0x1a8] sm:$0xff]
  %v109 = vld [vmem:[%s1 + $0x1b0] sm:$0xff]
  %v110 = vld [vmem:[%s1 + $0x1b8] sm:$0xff]
  %v111 = vld [vmem:[%s1 + $0x1c0] sm:$0xff]
  %v112 = vld [vmem:[%s1 + $0x1c8] sm:$0xff]
  %v113 = vld [vmem:[%s1 + $0x1d0] sm:$0xff]
  %v114 = vld [vmem:[%s1 + $0x1d8] sm:$0xff]
  %v115 = vld [vmem:[%s1 + $0x1e0] sm:$0xff]
  %v116 = vld [vmem:[%s1 + $0x1e8] sm:$0xff]
  %v117 = vld [vmem:[%s1 + $0x1f0] sm:$0xff]
  %v118 = vld [vmem:[%s1 + $0x1f8] sm:$0xff]
  %v119 = vld [vmem:[%s1 + $0x200] sm:$0xff]
  %v120 = vld [vmem:[%s1 + $0x208] sm:$0xff]
  %v121 = vld [vmem:[%s1 + $0x210] sm:$0xff]
  %v122 = vld [vmem:[%s1 + $0x218] sm:$0xff]
  %v123 = vld [vmem:[%s1 + $0x220] sm:$0xff]
  %v124 = vld [vmem:[%s1 + $0x228] sm:$0xff]
  %v125 = vld [vmem:[%s1 + $0x230] sm:$0xff]
  %v126 = vld [vmem:[%s1 + $0x238] sm:$0xff]
  %v127 = vld [vmem:[%s1 + $0x240] sm:$0xff]
  %v128 = vld [vmem:[%s1 + $0x248] sm:$0xff]
  %v129 = vld [vmem:[%s1 + $0x250] sm:$0xff]
  %v130 = vld [vmem:[%s1 + $0x258] sm:$0xff]
  %v131 = vld [vmem:[%s1 + $0x260] sm:$0xff]
  %v132 = vld [vmem:[%s1 + $0x268] sm:$0xff]
  %v133 = vld [vmem:[%s1 + $0x270] sm:$0xff]
  %v134 = vld [vmem:[%s1 + $0x278] sm:$0xff]
  %v135 = vld [vmem:[%s1 + $0x280] sm:$0xff]
  %v136 = vld [vmem:[%s1 + $0x288] sm:$0xff]
  %v137 = vld [vmem:[%s1 + $0x290] sm:$0xff]
  %v138 = vld [vmem:[%s1 + $0x298] sm:$0xff]
  %v139 = vld [vmem:[%s1 + $0x2a0] sm:$0xff]
  %v140 = vld [vmem:[%s1 + $0x2a8] sm:$0xff]
  %v141 = vld [vmem:[%s1 + $0x2b0] sm:$0xff]
  %v142 = vld [vmem:[%s1 + $0x2b8] sm:$0xff]
  %v143 = vld [vmem:[%s1 + $0x2c0] sm:$0xff]
  %v144 = vld [vmem:[%s1 + $0x2c8] sm:$0xff]
  %v145 = vld [vmem:[%s1 + $0x2d0] sm:$0xff]
  %v146 = vld [vmem:[%s1 + $0x2d8] sm:$0xff]
  %v147 = vld [vmem:[%s1 + $0x2e0] sm:$0xff]
  %v148 = vld [vmem:[%s1 + $0x2e8] sm:$0xff]
  %v149 = vld [vmem:[%s1 + $0x2f0] sm:$0xff]
  %v150 = vld [vmem:[%s1 + $0x2f8] sm:$0xff]
  %v152 = vlaneseq
  %v153 = vshrl.u32 %v152, 7
  %v154 = vsub.s32 0, %v153
  %v155 = vrot.slane %v37, %v154
  %157 = vmatprep.subr.mxu0 0.0
  %158 = vmatpush1.msra.mxu0 %v55
  %159 = vmatprep.subr.mxu0 0.0
  %160 = vmatpush1.msra.mxu0 %v56
  %161 = vmatprep.subr.mxu0 0.0
  %162 = vmatpush1.msra.mxu0 %v57
  %163 = vmatprep.subr.mxu0 0.0
  %164 = vmatpush1.msra.mxu0 %v58
  %165 = vmatprep.subr.mxu0 0.0
  %166 = vmatpush1.msra.mxu0 %v59
  %167 = vmatprep.subr.mxu0 0.0
  %168 = vmatpush1.msra.mxu0 %v60
  %169 = vmatprep.subr.mxu0 0.0
  %170 = vmatpush1.msra.mxu0 %v61
  %171 = vmatprep.subr.mxu0 0.0
  %172 = vmatpush1.msra.mxu0 %v62
  %173 = vmatprep.subr.mxu0 0.0
  %174 = vmatpush1.msra.mxu0 %v63
  %175 = vmatprep.subr.mxu0 0.0
  %176 = vmatpush1.msra.mxu0 %v64
  %177 = vmatprep.subr.mxu0 0.0
  %178 = vmatpush1.msra.mxu0 %v65
  %179 = vmatprep.subr.mxu0 0.0
  %180 = vmatpush1.msra.mxu0 %v66
  %181 = vmatprep.subr.mxu0 0.0
  %182 = vmatpush1.msra.mxu0 %v67
  %183 = vmatprep.subr.mxu0 0.0
  %184 = vmatpush1.msra.mxu0 %v68
  %185 = vmatprep.subr.mxu0 0.0
  %186 = vmatpush1.msra.mxu0 %v69
  %187 = vmatprep.subr.mxu0 0.0
  %188 = vmatpush1.msra.mxu0 %v70
  %189 = vmatprep.subr.mxu0 0.0
  %190 = vmatpush1.msra.mxu0 %v71
  %191 = vmatprep.subr.mxu0 0.0
  %192 = vmatpush1.msra.mxu0 %v72
  %193 = vmatprep.subr.mxu0 0.0
  %194 = vmatpush1.msra.mxu0 %v73
  %195 = vmatprep.subr.mxu0 0.0
  %196 = vmatpush1.msra.mxu0 %v74
  %197 = vmatprep.subr.mxu0 0.0
  %198 = vmatpush1.msra.mxu0 %v75
  %199 = vmatprep.subr.mxu0 0.0
  %200 = vmatpush1.msra.mxu0 %v76
  %201 = vmatprep.subr.mxu0 0.0
  %202 = vmatpush1.msra.mxu0 %v77
  %203 = vmatprep.subr.mxu0 0.0
  %204 = vmatpush1.msra.mxu0 %v78
  %205 = vmatprep.subr.mxu0 0.0
  %206 = vmatpush1.msra.mxu0 %v79
  %207 = vmatprep.subr.mxu0 0.0
  %208 = vmatpush1.msra.mxu0 %v80
  %209 = vmatprep.subr.mxu0 0.0
  %210 = vmatpush1.msra.mxu0 %v81
  %211 = vmatprep.subr.mxu0 0.0
  %212 = vmatpush1.msra.mxu0 %v82
  %213 = vmatprep.subr.mxu0 0.0
  %214 = vmatpush1.msra.mxu0 %v83
  %215 = vmatprep.subr.mxu0 0.0
  %216 = vmatpush1.msra.mxu0 %v84
  %217 = vmatprep.subr.mxu0 0.0
  %218 = vmatpush1.msra.mxu0 %v85
  %219 = vmatprep.subr.mxu0 0.0
  %220 = vmatpush1.msra.mxu0 %v86
  %221 = vmatprep.mubr.f32.mxu0 %v50
  %222 = vmatmul.mubr.f32.gmra.mrb[0].mxu0 %v49
  %v223 = vpop.f32.mrb[0].mxu0
  %v224 = vadd.f32 %v155, %v223
  %v225 = vpop.f32.mrb[0].mxu0
  %226 = vdwg.mxu0
  %227 = vmatprep.subr.mxu0 0.0
  %228 = vmatpush1.msra.mxu0 %v87
  %229 = vmatprep.subr.mxu0 0.0
  %230 = vmatpush1.msra.mxu0 %v88
  %231 = vmatprep.subr.mxu0 0.0
  %232 = vmatpush1.msra.mxu0 %v89
  %233 = vmatprep.subr.mxu0 0.0
  %234 = vmatpush1.msra.mxu0 %v90
  %235 = vmatprep.subr.mxu0 0.0
  %236 = vmatpush1.msra.mxu0 %v91
  %237 = vmatprep.subr.mxu0 0.0
  %238 = vmatpush1.msra.mxu0 %v92
  %239 = vmatprep.subr.mxu0 0.0
  %240 = vmatpush1.msra.mxu0 %v93
  %241 = vmatprep.subr.mxu0 0.0
  %242 = vmatpush1.msra.mxu0 %v94
  %243 = vmatprep.subr.mxu0 0.0
  %244 = vmatpush1.msra.mxu0 %v95
  %245 = vmatprep.subr.mxu0 0.0
  %246 = vmatpush1.msra.mxu0 %v96
  %247 = vmatprep.subr.mxu0 0.0
  %248 = vmatpush1.msra.mxu0 %v97
  %249 = vmatprep.subr.mxu0 0.0
  %250 = vmatpush1.msra.mxu0 %v98
  %251 = vmatprep.subr.mxu0 0.0
  %252 = vmatpush1.msra.mxu0 %v99
  %253 = vmatprep.subr.mxu0 0.0
  %254 = vmatpush1.msra.mxu0 %v100
  %255 = vmatprep.subr.mxu0 0.0
  %256 = vmatpush1.msra.mxu0 %v101
  %257 = vmatprep.subr.mxu0 0.0
  %258 = vmatpush1.msra.mxu0 %v102
  %259 = vmatprep.subr.mxu0 0.0
  %260 = vmatpush1.msra.mxu0 %v103
  %261 = vmatprep.subr.mxu0 0.0
  %262 = vmatpush1.msra.mxu0 %v104
  %263 = vmatprep.subr.mxu0 0.0
  %264 = vmatpush1.msra.mxu0 %v105
  %265 = vmatprep.subr.mxu0 0.0
  %266 = vmatpush1.msra.mxu0 %v106
  %267 = vmatprep.subr.mxu0 0.0
  %268 = vmatpush1.msra.mxu0 %v107
  %269 = vmatprep.subr.mxu0 0.0
  %270 = vmatpush1.msra.mxu0 %v108
  %271 = vmatprep.subr.mxu0 0.0
  %272 = vmatpush1.msra.mxu0 %v109
  %273 = vmatprep.subr.mxu0 0.0
  %274 = vmatpush1.msra.mxu0 %v110
  %275 = vmatprep.subr.mxu0 0.0
  %276 = vmatpush1.msra.mxu0 %v111
  %277 = vmatprep.subr.mxu0 0.0
  %278 = vmatpush1.msra.mxu0 %v112
  %279 = vmatprep.subr.mxu0 0.0
  %280 = vmatpush1.msra.mxu0 %v113
  %281 = vmatprep.subr.mxu0 0.0
  %282 = vmatpush1.msra.mxu0 %v114
  %283 = vmatprep.subr.mxu0 0.0
  %284 = vmatpush1.msra.mxu0 %v115
  %285 = vmatprep.subr.mxu0 0.0
  %286 = vmatpush1.msra.mxu0 %v116
  %287 = vmatprep.subr.mxu0 0.0
  %288 = vmatpush1.msra.mxu0 %v117
  %289 = vmatprep.subr.mxu0 0.0
  %290 = vmatpush1.msra.mxu0 %v118
  %291 = vmatprep.mubr.f32.mxu0 %v52
  %292 = vmatmul.mubr.f32.gmra.mrb[0].mxu0 %v51
  %v293 = vpop.f32.mrb[0].mxu0
  %v294 = vadd.f32 %v224, %v293
  %v295 = vpop.f32.mrb[0].mxu0
  %296 = vdwg.mxu0
  %297 = vmatprep.subr.mxu0 0.0
  %298 = vmatpush1.msra.mxu0 %v119
  %299 = vmatprep.subr.mxu0 0.0
  %300 = vmatpush1.msra.mxu0 %v120
  %301 = vmatprep.subr.mxu0 0.0
  %302 = vmatpush1.msra.mxu0 %v121
  %303 = vmatprep.subr.mxu0 0.0
  %304 = vmatpush1.msra.mxu0 %v122
  %305 = vmatprep.subr.mxu0 0.0
  %306 = vmatpush1.msra.mxu0 %v123
  %307 = vmatprep.subr.mxu0 0.0
  %308 = vmatpush1.msra.mxu0 %v124
  %309 = vmatprep.subr.mxu0 0.0
  %310 = vmatpush1.msra.mxu0 %v125
  %311 = vmatprep.subr.mxu0 0.0
  %312 = vmatpush1.msra.mxu0 %v126
  %313 = vmatprep.subr.mxu0 0.0
  %314 = vmatpush1.msra.mxu0 %v127
  %315 = vmatprep.subr.mxu0 0.0
  %316 = vmatpush1.msra.mxu0 %v128
  %317 = vmatprep.subr.mxu0 0.0
  %318 = vmatpush1.msra.mxu0 %v129
  %319 = vmatprep.subr.mxu0 0.0
  %320 = vmatpush1.msra.mxu0 %v130
  %321 = vmatprep.subr.mxu0 0.0
  %322 = vmatpush1.msra.mxu0 %v131
  %323 = vmatprep.subr.mxu0 0.0
  %324 = vmatpush1.msra.mxu0 %v132
  %325 = vmatprep.subr.mxu0 0.0
  %326 = vmatpush1.msra.mxu0 %v133
  %327 = vmatprep.subr.mxu0 0.0
  %328 = vmatpush1.msra.mxu0 %v134
  %329 = vmatprep.subr.mxu0 0.0
  %330 = vmatpush1.msra.mxu0 %v135
  %331 = vmatprep.subr.mxu0 0.0
  %332 = vmatpush1.msra.mxu0 %v136
  %333 = vmatprep.subr.mxu0 0.0
  %334 = vmatpush1.msra.mxu0 %v137
  %335 = vmatprep.subr.mxu0 0.0
  %336 = vmatpush1.msra.mxu0 %v138
  %337 = vmatprep.subr.mxu0 0.0
  %338 = vmatpush1.msra.mxu0 %v139
  %339 = vmatprep.subr.mxu0 0.0
  %340 = vmatpush1.msra.mxu0 %v140
  %341 = vmatprep.subr.mxu0 0.0
  %342 = vmatpush1.msra.mxu0 %v141
  %343 = vmatprep.subr.mxu0 0.0
  %344 = vmatpush1.msra.mxu0 %v142
  %345 = vmatprep.subr.mxu0 0.0
  %346 = vmatpush1.msra.mxu0 %v143
  %347 = vmatprep.subr.mxu0 0.0
  %348 = vmatpush1.msra.mxu0 %v144
  %349 = vmatprep.subr.mxu0 0.0
  %350 = vmatpush1.msra.mxu0 %v145
  %351 = vmatprep.subr.mxu0 0.0
  %352 = vmatpush1.msra.mxu0 %v146
  %353 = vmatprep.subr.mxu0 0.0
  %354 = vmatpush1.msra.mxu0 %v147
  %355 = vmatprep.subr.mxu0 0.0
  %356 = vmatpush1.msra.mxu0 %v148
  %357 = vmatprep.subr.mxu0 0.0
  %358 = vmatpush1.msra.mxu0 %v149
  %359 = vmatprep.subr.mxu0 0.0
  %360 = vmatpush1.msra.mxu0 %v150
  %361 = vmatprep.mubr.f32.mxu0 %v54
  %362 = vmatmul.mubr.f32.gmra.mrb[0].mxu0 %v53
  %v363 = vpop.f32.mrb[0].mxu0
  %v364 = vadd.f32 %v294, %v363
  %v365 = vpop.f32.mrb[0].mxu0
  %366 = vdwg.mxu0
  %v367 = vld [vmem:[%s4] sm:$0xff]
  %v368 = vld [vmem:[%s4 + $0x8] sm:$0xff]
  %v369 = vld [vmem:[%s4 + $0x10] sm:$0xff]
  %v370 = vld [vmem:[%s4 + $0x18] sm:$0xff]
  %v371 = vld [vmem:[%s4 + $0x20] sm:$0xff]
  %v372 = vld [vmem:[%s4 + $0x28] sm:$0xff]
  %v373 = vld [vmem:[%s4 + $0x30] sm:$0xff]
  %v374 = vld [vmem:[%s4 + $0x38] sm:$0xff]
  %v376 = vlaneseq
  %v377 = vshrl.u32 %v376, 7
  %v378 = vsub.s32 0, %v377
  %v379 = vrot.slane %v38, %v378
  %vm381 = vcmask 523264
  %v383 = vsel %vm381, %v364, 0
  %385 = vmatprep.subr.mxu0 0.0
  %386 = vmatpush1.msra.mxu0 %v367
  %387 = vmatprep.subr.mxu0 0.0
  %388 = vmatpush1.msra.mxu0 %v368
  %389 = vmatprep.subr.mxu0 0.0
  %390 = vmatpush1.msra.mxu0 %v369
  %391 = vmatprep.subr.mxu0 0.0
  %392 = vmatpush1.msra.mxu0 %v370
  %393 = vmatprep.subr.mxu0 0.0
  %394 = vmatpush1.msra.mxu0 %v371
  %395 = vmatprep.subr.mxu0 0.0
  %396 = vmatpush1.msra.mxu0 %v372
  %397 = vmatprep.subr.mxu0 0.0
  %398 = vmatpush1.msra.mxu0 %v373
  %399 = vmatprep.subr.mxu0 0.0
  %400 = vmatpush1.msra.mxu0 %v374
  %401 = vmatprep.subr.mxu0 0.0
  %402 = vmatpush1.msra.mxu0 0.0
  %403 = vmatprep.subr.mxu0 0.0
  %404 = vmatpush1.msra.mxu0 0.0
  %405 = vmatprep.subr.mxu0 0.0
  %406 = vmatpush1.msra.mxu0 0.0
  %407 = vmatprep.subr.mxu0 0.0
  %408 = vmatpush1.msra.mxu0 0.0
  %409 = vmatprep.subr.mxu0 0.0
  %410 = vmatpush1.msra.mxu0 0.0
  %411 = vmatprep.subr.mxu0 0.0
  %412 = vmatpush1.msra.mxu0 0.0
  %413 = vmatprep.subr.mxu0 0.0
  %414 = vmatpush1.msra.mxu0 0.0
  %415 = vmatprep.subr.mxu0 0.0
  %416 = vmatpush1.msra.mxu0 0.0
  %417 = vmatprep.subr.mxu0 0.0
  %418 = vmatpush1.msra.mxu0 0.0
  %419 = vmatprep.subr.mxu0 0.0
  %420 = vmatpush1.msra.mxu0 0.0
  %421 = vmatprep.subr.mxu0 0.0
  %422 = vmatpush1.msra.mxu0 0.0
  %423 = vmatprep.subr.mxu0 0.0
  %424 = vmatpush1.msra.mxu0 0.0
  %425 = vmatprep.subr.mxu0 0.0
  %426 = vmatpush1.msra.mxu0 0.0
  %427 = vmatprep.subr.mxu0 0.0
  %428 = vmatpush1.msra.mxu0 0.0
  %429 = vmatprep.subr.mxu0 0.0
  %430 = vmatpush1.msra.mxu0 0.0
  %431 = vmatprep.subr.mxu0 0.0
  %432 = vmatpush1.msra.mxu0 0.0
  %433 = vmatprep.subr.mxu0 0.0
  %434 = vmatpush1.msra.mxu0 0.0
  %435 = vmatprep.subr.mxu0 0.0
  %436 = vmatpush1.msra.mxu0 0.0
  %437 = vmatprep.subr.mxu0 0.0
  %438 = vmatpush1.msra.mxu0 0.0
  %439 = vmatprep.subr.mxu0 0.0
  %440 = vmatpush1.msra.mxu0 0.0
  %441 = vmatprep.subr.mxu0 0.0
  %442 = vmatpush1.msra.mxu0 0.0
  %443 = vmatprep.subr.mxu0 0.0
  %444 = vmatpush1.msra.mxu0 0.0
  %445 = vmatprep.subr.mxu0 0.0
  %446 = vmatpush1.msra.mxu0 0.0
  %447 = vmatprep.subr.mxu0 0.0
  %448 = vmatpush1.msra.mxu0 0.0
  %449 = vmatprep.mubr.f32.mxu0 0.0
  %450 = vmatmul.mubr.f32.gmra.mrb[0].mxu0 %v383
  %v451 = vpop.f32.mrb[0].mxu0
  %v452 = vadd.f32 %v379, %v451
  %v453 = vpop.f32.mrb[0].mxu0
  %454 = vdwg.mxu0
  %vm455 = vcmask 1041408
  %v456 = vsel %vm455, %v452, 0.0
  %v457 = vrot.slane %v456, 4
  %v458 = vadd.f32 %v456, %v457
  %v459 = vrot.slane %v458, 2
  %v460 = vadd.f32 %v458, %v459
  %v461 = vrot.slane %v460, 1
  %v462 = vadd.f32 %v460, %v461
  %v463 = vrcp.pop 2.0
  %v464 = vmul.f32 %v462, %v463
  %v465 = vsub.f32 %v452, %v464
  %v466 = vmul.f32 %v465, %v465
  %v467 = vsel %vm455, %v466, 0.0
  %v468 = vrot.slane %v467, 4
  %v469 = vadd.f32 %v467, %v468
  %v470 = vrot.slane %v469, 2
  %v471 = vadd.f32 %v469, %v470
  %v472 = vrot.slane %v471, 1
  %v473 = vadd.f32 %v471, %v472
  %v474 = vmul.f32 %v473, %v463
  %v475 = vadd.f32 %v474, 1e-05
  %v476 = vrsqrt.pop %v475
  %v477 = vmul.f32 %v465, %v476
  %v479 = vlaneseq
  %v480 = vshrl.u32 %v479, 7
  %v481 = vsub.s32 0, %v480
  %v482 = vrot.slane %v39, %v481
  %v484 = vmul.f32 %v477, %v482
  %v486 = vlaneseq
  %v487 = vshrl.u32 %v486, 7
  %v488 = vsub.s32 0, %v487
  %v489 = vrot.slane %v40, %v488
  %v491 = vadd.f32 %v484, %v489
  %v492 = vmax.f32 %v491, 0.0
  %v493 = vld [vmem:[%s5] sm:$0xff]
  %v494 = vld [vmem:[%s5 + $0x8] sm:$0xff]
  %v495 = vld [vmem:[%s5 + $0x10] sm:$0xff]
  %v496 = vld [vmem:[%s5 + $0x18] sm:$0xff]
  %v497 = vld [vmem:[%s5 + $0x20] sm:$0xff]
  %v498 = vld [vmem:[%s5 + $0x28] sm:$0xff]
  %v499 = vld [vmem:[%s5 + $0x30] sm:$0xff]
  %v500 = vld [vmem:[%s5 + $0x38] sm:$0xff]
  %v501 = vld [vmem:[%s5 + $0x40] sm:$0xff]
  %v502 = vld [vmem:[%s5 + $0x48] sm:$0xff]
  %v503 = vld [vmem:[%s5 + $0x50] sm:$0xff]
  %v504 = vld [vmem:[%s5 + $0x58] sm:$0xff]
  %v505 = vld [vmem:[%s5 + $0x60] sm:$0xff]
  %v506 = vld [vmem:[%s5 + $0x68] sm:$0xff]
  %v507 = vld [vmem:[%s5 + $0x70] sm:$0xff]
  %v508 = vld [vmem:[%s5 + $0x78] sm:$0xff]
  %v510 = vlaneseq
  %v511 = vshrl.u32 %v510, 7
  %v512 = vsub.s32 0, %v511
  %v513 = vrot.slane %v41, %v512
  %515 = vmatprep.subr.mxu0 0.0
  %516 = vmatpush1.msra.mxu0 %v493
  %517 = vmatprep.subr.mxu0 0.0
  %518 = vmatpush1.msra.mxu0 %v494
  %519 = vmatprep.subr.mxu0 0.0
  %520 = vmatpush1.msra.mxu0 %v495
  %521 = vmatprep.subr.mxu0 0.0
  %522 = vmatpush1.msra.mxu0 %v496
  %523 = vmatprep.subr.mxu0 0.0
  %524 = vmatpush1.msra.mxu0 %v497
  %525 = vmatprep.subr.mxu0 0.0
  %526 = vmatpush1.msra.mxu0 %v498
  %527 = vmatprep.subr.mxu0 0.0
  %528 = vmatpush1.msra.mxu0 %v499
  %529 = vmatprep.subr.mxu0 0.0
  %530 = vmatpush1.msra.mxu0 %v500
  %531 = vmatprep.subr.mxu0 0.0
  %532 = vmatpush1.msra.mxu0 %v501
  %533 = vmatprep.subr.mxu0 0.0
  %534 = vmatpush1.msra.mxu0 %v502
  %535 = vmatprep.subr.mxu0 0.0
  %536 = vmatpush1.msra.mxu0 %v503
  %537 = vmatprep.subr.mxu0 0.0
  %538 = vmatpush1.msra.mxu0 %v504
  %539 = vmatprep.subr.mxu0 0.0
  %540 = vmatpush1.msra.mxu0 %v505
  %541 = vmatprep.subr.mxu0 0.0
  %542 = vmatpush1.msra.mxu0 %v506
  %543 = vmatprep.subr.mxu0 0.0
  %544 = vmatpush1.msra.mxu0 %v507
  %545 = vmatprep.subr.mxu0 0.0
  %546 = vmatpush1.msra.mxu0 %v508
  %547 = vmatprep.subr.mxu0 0.0
  %548 = vmatpush1.msra.mxu0 0.0
  %549 = vmatprep.subr.mxu0 0.0
  %550 = vmatpush1.msra.mxu0 0.0
  %551 = vmatprep.subr.mxu0 0.0
  %552 = vmatpush1.msra.mxu0 0.0
  %553 = vmatprep.subr.mxu0 0.0
  %554 = vmatpush1.msra.mxu0 0.0
  %555 = vmatprep.subr.mxu0 0.0
  %556 = vmatpush1.msra.mxu0 0.0
  %557 = vmatprep.subr.mxu0 0.0
  %558 = vmatpush1.msra.mxu0 0.0
  %559 = vmatprep.subr.mxu0 0.0
  %560 = vmatpush1.msra.mxu0 0.0
  %561 = vmatprep.subr.mxu0 0.0
  %562 = vmatpush1.msra.mxu0 0.0
  %563 = vmatprep.subr.mxu0 0.0
  %564 = vmatpush1.msra.mxu0 0.0
  %565 = vmatprep.subr.mxu0 0.0
  %566 = vmatpush1.msra.mxu0 0.0
  %567 = vmatprep.subr.mxu0 0.0
  %568 = vmatpush1.msra.mxu0 0.0
  %569 = vmatprep.subr.mxu0 0.0
  %570 = vmatpush1.msra.mxu0 0.0
  %571 = vmatprep.subr.mxu0 0.0
  %572 = vmatpush1.msra.mxu0 0.0
  %573 = vmatprep.subr.mxu0 0.0
  %574 = vmatpush1.msra.mxu0 0.0
  %575 = vmatprep.subr.mxu0 0.0
  %576 = vmatpush1.msra.mxu0 0.0
  %577 = vmatprep.subr.mxu0 0.0
  %578 = vmatpush1.msra.mxu0 0.0
  %579 = vmatprep.mubr.f32.mxu0 0.0
  %580 = vmatmul.mubr.f32.gmra.mrb[0].mxu0 %v492
  %v581 = vpop.f32.mrb[0].mxu0
  %v582 = vadd.f32 %v513, %v581
  %v583 = vpop.f32.mrb[0].mxu0
  %584 = vdwg.mxu0
  %v585 = vsel %vm455, %v582, 0.0
  %v586 = vrot.slane %v585, 4
  %v587 = vadd.f32 %v585, %v586
  %v588 = vrot.slane %v587, 2
  %v589 = vadd.f32 %v587, %v588
  %v590 = vrot.slane %v589, 1
  %v591 = vadd.f32 %v589, %v590
  %v592 = vmul.f32 %v591, %v463
  %v593 = vsub.f32 %v582, %v592
  %v594 = vmul.f32 %v593, %v593
  %v595 = vsel %vm455, %v594, 0.0
  %v596 = vrot.slane %v595, 4
  %v597 = vadd.f32 %v595, %v596
  %v598 = vrot.slane %v597, 2
  %v599 = vadd.f32 %v597, %v598
  %v600 = vrot.slane %v599, 1
  %v601 = vadd.f32 %v599, %v600
  %v602 = vmul.f32 %v601, %v463
  %v603 = vadd.f32 %v602, 1e-05
  %v604 = vrsqrt.pop %v603
  %v605 = vmul.f32 %v593, %v604
  %v607 = vlaneseq
  %v608 = vshrl.u32 %v607, 7
  %v609 = vsub.s32 0, %v608
  %v610 = vrot.slane %v42, %v609
  %v612 = vmul.f32 %v605, %v610
  %v614 = vlaneseq
  %v615 = vshrl.u32 %v614, 7
  %v616 = vsub.s32 0, %v615
  %v617 = vrot.slane %v43, %v616
  %v619 = vadd.f32 %v612, %v617
  %v620 = vmax.f32 %v619, 0.0
  %v621 = vld [vmem:[%s6] sm:$0xff]
  %v622 = vld [vmem:[%s6 + $0x8] sm:$0xff]
  %v623 = vld [vmem:[%s6 + $0x10] sm:$0xff]
  %v624 = vld [vmem:[%s6 + $0x18] sm:$0xff]
  %v625 = vld [vmem:[%s6 + $0x20] sm:$0xff]
  %v626 = vld [vmem:[%s6 + $0x28] sm:$0xff]
  %v627 = vld [vmem:[%s6 + $0x30] sm:$0xff]
  %v628 = vld [vmem:[%s6 + $0x38] sm:$0xff]
  %v629 = vld [vmem:[%s6 + $0x40] sm:$0xff]
  %v630 = vld [vmem:[%s6 + $0x48] sm:$0xff]
  %v631 = vld [vmem:[%s6 + $0x50] sm:$0xff]
  %v632 = vld [vmem:[%s6 + $0x58] sm:$0xff]
  %v633 = vld [vmem:[%s6 + $0x60] sm:$0xff]
  %v634 = vld [vmem:[%s6 + $0x68] sm:$0xff]
  %v635 = vld [vmem:[%s6 + $0x70] sm:$0xff]
  %v636 = vld [vmem:[%s6 + $0x78] sm:$0xff]
  %v638 = vlaneseq
  %v639 = vshrl.u32 %v638, 7
  %v640 = vsub.s32 0, %v639
  %v641 = vrot.slane %v44, %v640
  %643 = vmatprep.subr.mxu0 0.0
  %644 = vmatpush1.msra.mxu0 %v621
  %645 = vmatprep.subr.mxu0 0.0
  %646 = vmatpush1.msra.mxu0 %v622
  %647 = vmatprep.subr.mxu0 0.0
  %648 = vmatpush1.msra.mxu0 %v623
  %649 = vmatprep.subr.mxu0 0.0
  %650 = vmatpush1.msra.mxu0 %v624
  %651 = vmatprep.subr.mxu0 0.0
  %652 = vmatpush1.msra.mxu0 %v625
  %653 = vmatprep.subr.mxu0 0.0
  %654 = vmatpush1.msra.mxu0 %v626
  %655 = vmatprep.subr.mxu0 0.0
  %656 = vmatpush1.msra.mxu0 %v627
  %657 = vmatprep.subr.mxu0 0.0
  %658 = vmatpush1.msra.mxu0 %v628
  %659 = vmatprep.subr.mxu0 0.0
  %660 = vmatpush1.msra.mxu0 %v629
  %661 = vmatprep.subr.mxu0 0.0
  %662 = vmatpush1.msra.mxu0 %v630
  %663 = vmatprep.subr.mxu0 0.0
  %664 = vmatpush1.msra.mxu0 %v631
  %665 = vmatprep.subr.mxu0 0.0
  %666 = vmatpush1.msra.mxu0 %v632
  %667 = vmatprep.subr.mxu0 0.0
  %668 = vmatpush1.msra.mxu0 %v633
  %669 = vmatprep.subr.mxu0 0.0
  %670 = vmatpush1.msra.mxu0 %v634
  %671 = vmatprep.subr.mxu0 0.0
  %672 = vmatpush1.msra.mxu0 %v635
  %673 = vmatprep.subr.mxu0 0.0
  %674 = vmatpush1.msra.mxu0 %v636
  %675 = vmatprep.subr.mxu0 0.0
  %676 = vmatpush1.msra.mxu0 0.0
  %677 = vmatprep.subr.mxu0 0.0
  %678 = vmatpush1.msra.mxu0 0.0
  %679 = vmatprep.subr.mxu0 0.0
  %680 = vmatpush1.msra.mxu0 0.0
  %681 = vmatprep.subr.mxu0 0.0
  %682 = vmatpush1.msra.mxu0 0.0
  %683 = vmatprep.subr.mxu0 0.0
  %684 = vmatpush1.msra.mxu0 0.0
  %685 = vmatprep.subr.mxu0 0.0
  %686 = vmatpush1.msra.mxu0 0.0
  %687 = vmatprep.subr.mxu0 0.0
  %688 = vmatpush1.msra.mxu0 0.0
  %689 = vmatprep.subr.mxu0 0.0
  %690 = vmatpush1.msra.mxu0 0.0
  %691 = vmatprep.subr.mxu0 0.0
  %692 = vmatpush1.msra.mxu0 0.0
  %693 = vmatprep.subr.mxu0 0.0
  %694 = vmatpush1.msra.mxu0 0.0
  %695 = vmatprep.subr.mxu0 0.0
  %696 = vmatpush1.msra.mxu0 0.0
  %697 = vmatprep.subr.mxu0 0.0
  %698 = vmatpush1.msra.mxu0 0.0
  %699 = vmatprep.subr.mxu0 0.0
  %700 = vmatpush1.msra.mxu0 0.0
  %701 = vmatprep.subr.mxu0 0.0
  %702 = vmatpush1.msra.mxu0 0.0
  %703 = vmatprep.subr.mxu0 0.0
  %704 = vmatpush1.msra.mxu0 0.0
  %705 = vmatprep.subr.mxu0 0.0
  %706 = vmatpush1.msra.mxu0 0.0
  %707 = vmatprep.mubr.f32.mxu0 0.0
  %708 = vmatmul.mubr.f32.gmra.mrb[0].mxu0 %v620
  %v709 = vpop.f32.mrb[0].mxu0
  %v710 = vadd.f32 %v641, %v709
  %v711 = vpop.f32.mrb[0].mxu0
  %712 = vdwg.mxu0
  %v713 = vrot.slane %v364, 2
  %v714 = vsel %vm381, %v713, 0
  %716 = vmatprep.subr.mxu0 0.0
  %717 = vmatpush1.msra.mxu0 %v367
  %718 = vmatprep.subr.mxu0 0.0
  %719 = vmatpush1.msra.mxu0 %v368
  %720 = vmatprep.subr.mxu0 0.0
  %721 = vmatpush1.msra.mxu0 %v369
  %722 = vmatprep.subr.mxu0 0.0
  %723 = vmatpush1.msra.mxu0 %v370
  %724 = vmatprep.subr.mxu0 0.0
  %725 = vmatpush1.msra.mxu0 %v371
  %726 = vmatprep.subr.mxu0 0.0
  %727 = vmatpush1.msra.mxu0 %v372
  %728 = vmatprep.subr.mxu0 0.0
  %729 = vmatpush1.msra.mxu0 %v373
  %730 = vmatprep.subr.mxu0 0.0
  %731 = vmatpush1.msra.mxu0 %v374
  %732 = vmatprep.subr.mxu0 0.0
  %733 = vmatpush1.msra.mxu0 0.0
  %734 = vmatprep.subr.mxu0 0.0
  %735 = vmatpush1.msra.mxu0 0.0
  %736 = vmatprep.subr.mxu0 0.0
  %737 = vmatpush1.msra.mxu0 0.0
  %738 = vmatprep.subr.mxu0 0.0
  %739 = vmatpush1.msra.mxu0 0.0
  %740 = vmatprep.subr.mxu0 0.0
  %741 = vmatpush1.msra.mxu0 0.0
  %742 = vmatprep.subr.mxu0 0.0
  %743 = vmatpush1.msra.mxu0 0.0
  %744 = vmatprep.subr.mxu0 0.0
  %745 = vmatpush1.msra.mxu0 0.0
  %746 = vmatprep.subr.mxu0 0.0
  %747 = vmatpush1.msra.mxu0 0.0
  %748 = vmatprep.subr.mxu0 0.0
  %749 = vmatpush1.msra.mxu0 0.0
  %750 = vmatprep.subr.mxu0 0.0
  %751 = vmatpush1.msra.mxu0 0.0
  %752 = vmatprep.subr.mxu0 0.0
  %753 = vmatpush1.msra.mxu0 0.0
  %754 = vmatprep.subr.mxu0 0.0
  %755 = vmatpush1.msra.mxu0 0.0
  %756 = vmatprep.subr.mxu0 0.0
  %757 = vmatpush1.msra.mxu0 0.0
  %758 = vmatprep.subr.mxu0 0.0
  %759 = vmatpush1.msra.mxu0 0.0
  %760 = vmatprep.subr.mxu0 0.0
  %761 = vmatpush1.msra.mxu0 0.0
  %762 = vmatprep.subr.mxu0 0.0
  %763 = vmatpush1.msra.mxu0 0.0
  %764 = vmatprep.subr.mxu0 0.0
  %765 = vmatpush1.msra.mxu0 0.0
  %766 = vmatprep.subr.mxu0 0.0
  %767 = vmatpush1.msra.mxu0 0.0
  %768 = vmatprep.subr.mxu0 0.0
  %769 = vmatpush1.msra.mxu0 0.0
  %770 = vmatprep.subr.mxu0 0.0
  %771 = vmatpush1.msra.mxu0 0.0
  %772 = vmatprep.subr.mxu0 0.0
  %773 = vmatpush1.msra.mxu0 0.0
  %774 = vmatprep.subr.mxu0 0.0
  %775 = vmatpush1.msra.mxu0 0.0
  %776 = vmatprep.subr.mxu0 0.0
  %777 = vmatpush1.msra.mxu0 0.0
  %778 = vmatprep.subr.mxu0 0.0
  %779 = vmatpush1.msra.mxu0 0.0
  %780 = vmatprep.mubr.f32.mxu0 0.0
  %781 = vmatmul.mubr.f32.gmra.mrb[0].mxu0 %v714
  %v782 = vpop.f32.mrb[0].mxu0
  %v783 = vadd.f32 %v379, %v782
  %v784 = vpop.f32.mrb[0].mxu0
  %785 = vdwg.mxu0
  %v786 = vsel %vm455, %v783, 0.0
  %v787 = vrot.slane %v786, 4
  %v788 = vadd.f32 %v786, %v787
  %v789 = vrot.slane %v788, 2
  %v790 = vadd.f32 %v788, %v789
  %v791 = vrot.slane %v790, 1
  %v792 = vadd.f32 %v790, %v791
  %v793 = vmul.f32 %v792, %v463
  %v794 = vsub.f32 %v783, %v793
  %v795 = vmul.f32 %v794, %v794
  %v796 = vsel %vm455, %v795, 0.0
  %v797 = vrot.slane %v796, 4
  %v798 = vadd.f32 %v796, %v797
  %v799 = vrot.slane %v798, 2
  %v800 = vadd.f32 %v798, %v799
  %v801 = vrot.slane %v800, 1
  %v802 = vadd.f32 %v800, %v801
  %v803 = vmul.f32 %v802, %v463
  %v804 = vadd.f32 %v803, 1e-05
  %v805 = vrsqrt.pop %v804
  %v806 = vmul.f32 %v794, %v805
  %v807 = vmul.f32 %v806, %v482
  %v808 = vadd.f32 %v807, %v489
  %v809 = vmax.f32 %v808, 0.0
  %810 = vmatprep.subr.mxu0 0.0
  %811 = vmatpush1.msra.mxu0 %v493
  %812 = vmatprep.subr.mxu0 0.0
  %813 = vmatpush1.msra.mxu0 %v494
  %814 = vmatprep.subr.mxu0 0.0
  %815 = vmatpush1.msra.mxu0 %v495
  %816 = vmatprep.subr.mxu0 0.0
  %817 = vmatpush1.msra.mxu0 %v496
  %818 = vmatprep.subr.mxu0 0.0
  %819 = vmatpush1.msra.mxu0 %v497
  %820 = vmatprep.subr.mxu0 0.0
  %821 = vmatpush1.msra.mxu0 %v498
  %822 = vmatprep.subr.mxu0 0.0
  %823 = vmatpush1.msra.mxu0 %v499
  %824 = vmatprep.subr.mxu0 0.0
  %825 = vmatpush1.msra.mxu0 %v500
  %826 = vmatprep.subr.mxu0 0.0
  %827 = vmatpush1.msra.mxu0 %v501
  %828 = vmatprep.subr.mxu0 0.0
  %829 = vmatpush1.msra.mxu0 %v502
  %830 = vmatprep.subr.mxu0 0.0
  %831 = vmatpush1.msra.mxu0 %v503
  %832 = vmatprep.subr.mxu0 0.0
  %833 = vmatpush1.msra.mxu0 %v504
  %834 = vmatprep.subr.mxu0 0.0
  %835 = vmatpush1.msra.mxu0 %v505
  %836 = vmatprep.subr.mxu0 0.0
  %837 = vmatpush1.msra.mxu0 %v506
  %838 = vmatprep.subr.mxu0 0.0
  %839 = vmatpush1.msra.mxu0 %v507
  %840 = vmatprep.subr.mxu0 0.0
  %841 = vmatpush1.msra.mxu0 %v508
  %842 = vmatprep.subr.mxu0 0.0
  %843 = vmatpush1.msra.mxu0 0.0
  %844 = vmatprep.subr.mxu0 0.0
  %845 = vmatpush1.msra.mxu0 0.0
  %846 = vmatprep.subr.mxu0 0.0
  %847 = vmatpush1.msra.mxu0 0.0
  %848 = vmatprep.subr.mxu0 0.0
  %849 = vmatpush1.msra.mxu0 0.0
  %850 = vmatprep.subr.mxu0 0.0
  %851 = vmatpush1.msra.mxu0 0.0
  %852 = vmatprep.subr.mxu0 0.0
  %853 = vmatpush1.msra.mxu0 0.0
  %854 = vmatprep.subr.mxu0 0.0
  %855 = vmatpush1.msra.mxu0 0.0
  %856 = vmatprep.subr.mxu0 0.0
  %857 = vmatpush1.msra.mxu0 0.0
  %858 = vmatprep.subr.mxu0 0.0
  %859 = vmatpush1.msra.mxu0 0.0
  %860 = vmatprep.subr.mxu0 0.0
  %861 = vmatpush1.msra.mxu0 0.0
  %862 = vmatprep.subr.mxu0 0.0
  %863 = vmatpush1.msra.mxu0 0.0
  %864 = vmatprep.subr.mxu0 0.0
  %865 = vmatpush1.msra.mxu0 0.0
  %866 = vmatprep.subr.mxu0 0.0
  %867 = vmatpush1.msra.mxu0 0.0
  %868 = vmatprep.subr.mxu0 0.0
  %869 = vmatpush1.msra.mxu0 0.0
  %870 = vmatprep.subr.mxu0 0.0
  %871 = vmatpush1.msra.mxu0 0.0
  %872 = vmatprep.subr.mxu0 0.0
  %873 = vmatpush1.msra.mxu0 0.0
  %874 = vmatprep.mubr.f32.mxu0 0.0
  %875 = vmatmul.mubr.f32.gmra.mrb[0].mxu0 %v809
  %v876 = vpop.f32.mrb[0].mxu0
  %v877 = vadd.f32 %v513, %v876
  %v878 = vpop.f32.mrb[0].mxu0
  %879 = vdwg.mxu0
  %v880 = vsel %vm455, %v877, 0.0
  %v881 = vrot.slane %v880, 4
  %v882 = vadd.f32 %v880, %v881
  %v883 = vrot.slane %v882, 2
  %v884 = vadd.f32 %v882, %v883
  %v885 = vrot.slane %v884, 1
  %v886 = vadd.f32 %v884, %v885
  %v887 = vmul.f32 %v886, %v463
  %v888 = vsub.f32 %v877, %v887
  %v889 = vmul.f32 %v888, %v888
  %v890 = vsel %vm455, %v889, 0.0
  %v891 = vrot.slane %v890, 4
  %v892 = vadd.f32 %v890, %v891
  %v893 = vrot.slane %v892, 2
  %v894 = vadd.f32 %v892, %v893
  %v895 = vrot.slane %v894, 1
  %v896 = vadd.f32 %v894, %v895
  %v897 = vmul.f32 %v896, %v463
  %v898 = vadd.f32 %v897, 1e-05
  %v899 = vrsqrt.pop %v898
  %v900 = vmul.f32 %v888, %v899
  %v901 = vmul.f32 %v900, %v610
  %v902 = vadd.f32 %v901, %v617
  %v903 = vmax.f32 %v902, 0.0
  %904 = vmatprep.subr.mxu0 0.0
  %905 = vmatpush1.msra.mxu0 %v621
  %906 = vmatprep.subr.mxu0 0.0
  %907 = vmatpush1.msra.mxu0 %v622
  %908 = vmatprep.subr.mxu0 0.0
  %909 = vmatpush1.msra.mxu0 %v623
  %910 = vmatprep.subr.mxu0 0.0
  %911 = vmatpush1.msra.mxu0 %v624
  %912 = vmatprep.subr.mxu0 0.0
  %913 = vmatpush1.msra.mxu0 %v625
  %914 = vmatprep.subr.mxu0 0.0
  %915 = vmatpush1.msra.mxu0 %v626
  %916 = vmatprep.subr.mxu0 0.0
  %917 = vmatpush1.msra.mxu0 %v627
  %918 = vmatprep.subr.mxu0 0.0
  %919 = vmatpush1.msra.mxu0 %v628
  %920 = vmatprep.subr.mxu0 0.0
  %921 = vmatpush1.msra.mxu0 %v629
  %922 = vmatprep.subr.mxu0 0.0
  %923 = vmatpush1.msra.mxu0 %v630
  %924 = vmatprep.subr.mxu0 0.0
  %925 = vmatpush1.msra.mxu0 %v631
  %926 = vmatprep.subr.mxu0 0.0
  %927 = vmatpush1.msra.mxu0 %v632
  %928 = vmatprep.subr.mxu0 0.0
  %929 = vmatpush1.msra.mxu0 %v633
  %930 = vmatprep.subr.mxu0 0.0
  %931 = vmatpush1.msra.mxu0 %v634
  %932 = vmatprep.subr.mxu0 0.0
  %933 = vmatpush1.msra.mxu0 %v635
  %934 = vmatprep.subr.mxu0 0.0
  %935 = vmatpush1.msra.mxu0 %v636
  %936 = vmatprep.subr.mxu0 0.0
  %937 = vmatpush1.msra.mxu0 0.0
  %938 = vmatprep.subr.mxu0 0.0
  %939 = vmatpush1.msra.mxu0 0.0
  %940 = vmatprep.subr.mxu0 0.0
  %941 = vmatpush1.msra.mxu0 0.0
  %942 = vmatprep.subr.mxu0 0.0
  %943 = vmatpush1.msra.mxu0 0.0
  %944 = vmatprep.subr.mxu0 0.0
  %945 = vmatpush1.msra.mxu0 0.0
  %946 = vmatprep.subr.mxu0 0.0
  %947 = vmatpush1.msra.mxu0 0.0
  %948 = vmatprep.subr.mxu0 0.0
  %949 = vmatpush1.msra.mxu0 0.0
  %950 = vmatprep.subr.mxu0 0.0
  %951 = vmatpush1.msra.mxu0 0.0
  %952 = vmatprep.subr.mxu0 0.0
  %953 = vmatpush1.msra.mxu0 0.0
  %954 = vmatprep.subr.mxu0 0.0
  %955 = vmatpush1.msra.mxu0 0.0
  %956 = vmatprep.subr.mxu0 0.0
  %957 = vmatpush1.msra.mxu0 0.0
  %958 = vmatprep.subr.mxu0 0.0
  %959 = vmatpush1.msra.mxu0 0.0
  %960 = vmatprep.subr.mxu0 0.0
  %961 = vmatpush1.msra.mxu0 0.0
  %962 = vmatprep.subr.mxu0 0.0
  %963 = vmatpush1.msra.mxu0 0.0
  %964 = vmatprep.subr.mxu0 0.0
  %965 = vmatpush1.msra.mxu0 0.0
  %966 = vmatprep.subr.mxu0 0.0
  %967 = vmatpush1.msra.mxu0 0.0
  %968 = vmatprep.mubr.f32.mxu0 0.0
  %969 = vmatmul.mubr.f32.gmra.mrb[0].mxu0 %v903
  %v970 = vpop.f32.mrb[0].mxu0
  %v971 = vadd.f32 %v641, %v970
  %v972 = vpop.f32.mrb[0].mxu0
  %973 = vdwg.mxu0
  %v974 = vld [vmem:[%s2] sm:$0xff]
  %v975 = vld [vmem:[%s2 + $0x8] sm:$0xff]
  %v976 = vld [vmem:[%s3] sm:$0x3]
  %v977 = vlaneseq
  %v978 = vshrl.u32 %v977, 7
  %v979 = vsub.s32 0, %v978
  %v980 = vrot.slane %v976, %v979
  %982 = vbcast.lane.b32.xlu0 %v980, 256
  %v983 = vpop.permute.xlu0 %982
  %v984 = vlaneseq
  %v985 = vshrl.u32 %v984, 7
  %v986 = vsub.s32 1, %v985
  %v987 = vrot.slane %v976, %v986
  %989 = vbcast.lane.b32.xlu0 %v987, 256
  %v990 = vpop.permute.xlu0 %989
  %v991 = vmul.f32 %v974, %v983
  %v992 = vmul.f32 %v975, %v990
  %vm993 = vcmask 261120
  %v994 = vsel %vm993, %v991, 0.0
  %v995 = vrot.slane %v994, 4
  %v996 = vadd.f32 %v994, %v995
  %v997 = vrot.slane %v996, 2
  %v998 = vadd.f32 %v996, %v997
  %v999 = vrot.slane %v998, 1
  %v1000 = vadd.f32 %v998, %v999
  %v1001 = vsel %vm993, %v992, 0.0
  %v1002 = vrot.slane %v1001, 4
  %v1003 = vadd.f32 %v1001, %v1002
  %v1004 = vrot.slane %v1003, 2
  %v1005 = vadd.f32 %v1003, %v1004
  %v1006 = vrot.slane %v1005, 1
  %v1007 = vadd.f32 %v1005, %v1006
  %vm1008 = vcmask 58368
  %v1009 = vsel %vm1008, %v976, 0.0
  %1010 = vadd.xlane.f32.xlu0 %v1009
  %v1011 = vpop.xlane.xlu0 %1010
  %v1012 = vmax.f32 %v1011, 1.0
  %v1014 = vrot.slane %v1012, 1
  %v1017 = vrcp.pop %v1012
  %v1018 = vmul.f32 %v1000, %v1017
  %v1019 = vrcp.pop %v1014
  %v1020 = vmul.f32 %v1007, %v1019
  %v1021 = vld [vmem:[%s7] sm:$0xff]
  %v1022 = vld [vmem:[%s7 + $0x8] sm:$0xff]
  %v1023 = vld [vmem:[%s7 + $0x10] sm:$0xff]
  %v1024 = vld [vmem:[%s7 + $0x18] sm:$0xff]
  %v1025 = vld [vmem:[%s7 + $0x20] sm:$0xff]
  %v1026 = vld [vmem:[%s7 + $0x28] sm:$0xff]
  %v1027 = vld [vmem:[%s7 + $0x30] sm:$0xff]
  %v1028 = vld [vmem:[%s7 + $0x38] sm:$0xff]
  %v1030 = vlaneseq
  %v1031 = vshrl.u32 %v1030, 7
  %v1032 = vsub.s32 0, %v1031
  %v1033 = vrot.slane %v45, %v1032
  %v1035 = vrot.slane %v364, 4
  %v1036 = vsel %vm381, %v1035, 0
  %1038 = vmatprep.subr.mxu0 0.0
  %1039 = vmatpush1.msra.mxu0 %v1021
  %1040 = vmatprep.subr.mxu0 0.0
  %1041 = vmatpush1.msra.mxu0 %v1022
  %1042 = vmatprep.subr.mxu0 0.0
  %1043 = vmatpush1.msra.mxu0 %v1023
  %1044 = vmatprep.subr.mxu0 0.0
  %1045 = vmatpush1.msra.mxu0 %v1024
  %1046 = vmatprep.subr.mxu0 0.0
  %1047 = vmatpush1.msra.mxu0 %v1025
  %1048 = vmatprep.subr.mxu0 0.0
  %1049 = vmatpush1.msra.mxu0 %v1026
  %1050 = vmatprep.subr.mxu0 0.0
  %1051 = vmatpush1.msra.mxu0 %v1027
  %1052 = vmatprep.subr.mxu0 0.0
  %1053 = vmatpush1.msra.mxu0 %v1028
  %1054 = vmatprep.subr.mxu0 0.0
  %1055 = vmatpush1.msra.mxu0 0.0
  %1056 = vmatprep.subr.mxu0 0.0
  %1057 = vmatpush1.msra.mxu0 0.0
  %1058 = vmatprep.subr.mxu0 0.0
  %1059 = vmatpush1.msra.mxu0 0.0
  %1060 = vmatprep.subr.mxu0 0.0
  %1061 = vmatpush1.msra.mxu0 0.0
  %1062 = vmatprep.subr.mxu0 0.0
  %1063 = vmatpush1.msra.mxu0 0.0
  %1064 = vmatprep.subr.mxu0 0.0
  %1065 = vmatpush1.msra.mxu0 0.0
  %1066 = vmatprep.subr.mxu0 0.0
  %1067 = vmatpush1.msra.mxu0 0.0
  %1068 = vmatprep.subr.mxu0 0.0
  %1069 = vmatpush1.msra.mxu0 0.0
  %1070 = vmatprep.subr.mxu0 0.0
  %1071 = vmatpush1.msra.mxu0 0.0
  %1072 = vmatprep.subr.mxu0 0.0
  %1073 = vmatpush1.msra.mxu0 0.0
  %1074 = vmatprep.subr.mxu0 0.0
  %1075 = vmatpush1.msra.mxu0 0.0
  %1076 = vmatprep.subr.mxu0 0.0
  %1077 = vmatpush1.msra.mxu0 0.0
  %1078 = vmatprep.subr.mxu0 0.0
  %1079 = vmatpush1.msra.mxu0 0.0
  %1080 = vmatprep.subr.mxu0 0.0
  %1081 = vmatpush1.msra.mxu0 0.0
  %1082 = vmatprep.subr.mxu0 0.0
  %1083 = vmatpush1.msra.mxu0 0.0
  %1084 = vmatprep.subr.mxu0 0.0
  %1085 = vmatpush1.msra.mxu0 0.0
  %1086 = vmatprep.subr.mxu0 0.0
  %1087 = vmatpush1.msra.mxu0 0.0
  %1088 = vmatprep.subr.mxu0 0.0
  %1089 = vmatpush1.msra.mxu0 0.0
  %1090 = vmatprep.subr.mxu0 0.0
  %1091 = vmatpush1.msra.mxu0 0.0
  %1092 = vmatprep.subr.mxu0 0.0
  %1093 = vmatpush1.msra.mxu0 0.0
  %1094 = vmatprep.subr.mxu0 0.0
  %1095 = vmatpush1.msra.mxu0 0.0
  %1096 = vmatprep.subr.mxu0 0.0
  %1097 = vmatpush1.msra.mxu0 0.0
  %1098 = vmatprep.subr.mxu0 0.0
  %1099 = vmatpush1.msra.mxu0 0.0
  %1100 = vmatprep.subr.mxu0 0.0
  %1101 = vmatpush1.msra.mxu0 0.0
  %1102 = vmatprep.mubr.f32.mxu0 0.0
  %1103 = vmatmul.mubr.f32.gmra.mrb[0].mxu0 %v1036
  %v1104 = vpop.f32.mrb[0].mxu0
  %v1105 = vadd.f32 %v1033, %v1104
  %v1106 = vpop.f32.mrb[0].mxu0
  %1107 = vdwg.mxu0
  %v1108 = vld [vmem:[%s8] sm:$0xff]
  %v1109 = vld [vmem:[%s8 + $0x8] sm:$0xff]
  %v1110 = vld [vmem:[%s8 + $0x10] sm:$0xff]
  %v1111 = vld [vmem:[%s8 + $0x18] sm:$0xff]
  %v1113 = vlaneseq
  %v1114 = vshrl.u32 %v1113, 7
  %v1115 = vsub.s32 0, %v1114
  %v1116 = vrot.slane %v46, %v1115
  %v1120 = vrot.slane %v1020, 7
  %vm1121 = vcmask 1041409
  %v1122 = vsel %vm1121, %v1120, %v1018
  %v1123 = vsel %vm993, %v1122, 0
  %1125 = vmatprep.subr.mxu0 0.0
  %1126 = vmatpush1.msra.mxu0 %v1108
  %1127 = vmatprep.subr.mxu0 0.0
  %1128 = vmatpush1.msra.mxu0 %v1109
  %1129 = vmatprep.subr.mxu0 0.0
  %1130 = vmatpush1.msra.mxu0 %v1110
  %1131 = vmatprep.subr.mxu0 0.0
  %1132 = vmatpush1.msra.mxu0 %v1111
  %1133 = vmatprep.subr.mxu0 0.0
  %1134 = vmatpush1.msra.mxu0 0.0
  %1135 = vmatprep.subr.mxu0 0.0
  %1136 = vmatpush1.msra.mxu0 0.0
  %1137 = vmatprep.subr.mxu0 0.0
  %1138 = vmatpush1.msra.mxu0 0.0
  %1139 = vmatprep.subr.mxu0 0.0
  %1140 = vmatpush1.msra.mxu0 0.0
  %1141 = vmatprep.subr.mxu0 0.0
  %1142 = vmatpush1.msra.mxu0 0.0
  %1143 = vmatprep.subr.mxu0 0.0
  %1144 = vmatpush1.msra.mxu0 0.0
  %1145 = vmatprep.subr.mxu0 0.0
  %1146 = vmatpush1.msra.mxu0 0.0
  %1147 = vmatprep.subr.mxu0 0.0
  %1148 = vmatpush1.msra.mxu0 0.0
  %1149 = vmatprep.subr.mxu0 0.0
  %1150 = vmatpush1.msra.mxu0 0.0
  %1151 = vmatprep.subr.mxu0 0.0
  %1152 = vmatpush1.msra.mxu0 0.0
  %1153 = vmatprep.subr.mxu0 0.0
  %1154 = vmatpush1.msra.mxu0 0.0
  %1155 = vmatprep.subr.mxu0 0.0
  %1156 = vmatpush1.msra.mxu0 0.0
  %1157 = vmatprep.subr.mxu0 0.0
  %1158 = vmatpush1.msra.mxu0 0.0
  %1159 = vmatprep.subr.mxu0 0.0
  %1160 = vmatpush1.msra.mxu0 0.0
  %1161 = vmatprep.subr.mxu0 0.0
  %1162 = vmatpush1.msra.mxu0 0.0
  %1163 = vmatprep.subr.mxu0 0.0
  %1164 = vmatpush1.msra.mxu0 0.0
  %1165 = vmatprep.subr.mxu0 0.0
  %1166 = vmatpush1.msra.mxu0 0.0
  %1167 = vmatprep.subr.mxu0 0.0
  %1168 = vmatpush1.msra.mxu0 0.0
  %1169 = vmatprep.subr.mxu0 0.0
  %1170 = vmatpush1.msra.mxu0 0.0
  %1171 = vmatprep.subr.mxu0 0.0
  %1172 = vmatpush1.msra.mxu0 0.0
  %1173 = vmatprep.subr.mxu0 0.0
  %1174 = vmatpush1.msra.mxu0 0.0
  %1175 = vmatprep.subr.mxu0 0.0
  %1176 = vmatpush1.msra.mxu0 0.0
  %1177 = vmatprep.subr.mxu0 0.0
  %1178 = vmatpush1.msra.mxu0 0.0
  %1179 = vmatprep.subr.mxu0 0.0
  %1180 = vmatpush1.msra.mxu0 0.0
  %1181 = vmatprep.subr.mxu0 0.0
  %1182 = vmatpush1.msra.mxu0 0.0
  %1183 = vmatprep.subr.mxu0 0.0
  %1184 = vmatpush1.msra.mxu0 0.0
  %1185 = vmatprep.subr.mxu0 0.0
  %1186 = vmatpush1.msra.mxu0 0.0
  %1187 = vmatprep.subr.mxu0 0.0
  %1188 = vmatpush1.msra.mxu0 0.0
  %1189 = vmatprep.mubr.f32.mxu0 0.0
  %1190 = vmatmul.mubr.f32.gmra.mrb[0].mxu0 %v1123
  %v1191 = vpop.f32.mrb[0].mxu0
  %v1192 = vadd.f32 %v1116, %v1191
  %v1193 = vpop.f32.mrb[0].mxu0
  %1194 = vdwg.mxu0
  %v1195 = vmul.f32 %v1105, %v1105
  %vm1196 = vcmask 254976
  %v1197 = vsel %vm1196, %v1195, 0.0
  %1198 = vadd.xlane.f32.xlu0 %v1197
  %v1199 = vpop.xlane.xlu0 %1198
  %v1200 = vrsqrt.pop %v1199
  %v1201 = vmul.f32 %v1199, %v1200
  %vm1202 = vcmp.eq.f32.partialorder %v1199, inf
  %v1203 = vsel %vm1202, %v1199, %v1201
  %vm1204 = vcmp.eq.f32.partialorder %v1199, 0.0
  %v1205 = vand.u32 %v1199, 2147483648
  %v1206 = vsel %vm1204, %v1205, %v1203
  %v1207 = vmax.f32 %v1206, 1e-12
  %v1208 = vrcp.pop %v1207
  %v1209 = vmul.f32 %v1105, %v1208
  %v1210 = vmul.f32 %v1192, %v1192
  %v1211 = vsel %vm1196, %v1210, 0.0
  %1212 = vadd.xlane.f32.xlu0 %v1211
  %v1213 = vpop.xlane.xlu0 %1212
  %v1214 = vrsqrt.pop %v1213
  %v1215 = vmul.f32 %v1213, %v1214
  %vm1216 = vcmp.eq.f32.partialorder %v1213, inf
  %v1217 = vsel %vm1216, %v1213, %v1215
  %vm1218 = vcmp.eq.f32.partialorder %v1213, 0.0
  %v1219 = vand.u32 %v1213, 2147483648
  %v1220 = vsel %vm1218, %v1219, %v1217
  %v1221 = vmax.f32 %v1220, 1e-12
  %v1222 = vrcp.pop %v1221
  %v1223 = vmul.f32 %v1192, %v1222
  %v1224 = vstv %s48
  %v1225 = vmul.f32 %v1224, 1.442695
  %v1226 = vpow.pop %v1225
  %s1227 = vtos %v1226
  %v1229 = vsel %vm993, %v1209, 0
  %v1232 = vsel %vm993, %v1223, 0
  %1234 = vmatprep.subr.mxu0 0.0
  %1235 = vmatpush1.xpose.msra.mxu0 %v1232
  %1236 = vmatprep.subr.mxu0 0.0
  %1237 = vmatpush1.xpose.msra.mxu0 0.0
  %1238 = vmatprep.subr.mxu0 0.0
  %1239 = vmatpush1.xpose.msra.mxu0 0.0
  %1240 = vmatprep.subr.mxu0 0.0
  %1241 = vmatpush1.xpose.msra.mxu0 0.0
  %1242 = vmatprep.subr.mxu0 0.0
  %1243 = vmatpush1.xpose.msra.mxu0 0.0
  %1244 = vmatprep.subr.mxu0 0.0
  %1245 = vmatpush1.xpose.msra.mxu0 0.0
  %1246 = vmatprep.subr.mxu0 0.0
  %1247 = vmatpush1.xpose.msra.mxu0 0.0
  %1248 = vmatprep.subr.mxu0 0.0
  %1249 = vmatpush1.xpose.msra.mxu0 0.0
  %1250 = vmatprep.subr.mxu0 0.0
  %1251 = vmatpush1.xpose.msra.mxu0 0.0
  %1252 = vmatprep.subr.mxu0 0.0
  %1253 = vmatpush1.xpose.msra.mxu0 0.0
  %1254 = vmatprep.subr.mxu0 0.0
  %1255 = vmatpush1.xpose.msra.mxu0 0.0
  %1256 = vmatprep.subr.mxu0 0.0
  %1257 = vmatpush1.xpose.msra.mxu0 0.0
  %1258 = vmatprep.subr.mxu0 0.0
  %1259 = vmatpush1.xpose.msra.mxu0 0.0
  %1260 = vmatprep.subr.mxu0 0.0
  %1261 = vmatpush1.xpose.msra.mxu0 0.0
  %1262 = vmatprep.subr.mxu0 0.0
  %1263 = vmatpush1.xpose.msra.mxu0 0.0
  %1264 = vmatprep.subr.mxu0 0.0
  %1265 = vmatpush1.xpose.msra.mxu0 0.0
  %1266 = vmatprep.subr.mxu0 0.0
  %1267 = vmatpush1.xpose.msra.mxu0 0.0
  %1268 = vmatprep.subr.mxu0 0.0
  %1269 = vmatpush1.xpose.msra.mxu0 0.0
  %1270 = vmatprep.subr.mxu0 0.0
  %1271 = vmatpush1.xpose.msra.mxu0 0.0
  %1272 = vmatprep.subr.mxu0 0.0
  %1273 = vmatpush1.xpose.msra.mxu0 0.0
  %1274 = vmatprep.subr.mxu0 0.0
  %1275 = vmatpush1.xpose.msra.mxu0 0.0
  %1276 = vmatprep.subr.mxu0 0.0
  %1277 = vmatpush1.xpose.msra.mxu0 0.0
  %1278 = vmatprep.subr.mxu0 0.0
  %1279 = vmatpush1.xpose.msra.mxu0 0.0
  %1280 = vmatprep.subr.mxu0 0.0
  %1281 = vmatpush1.xpose.msra.mxu0 0.0
  %1282 = vmatprep.subr.mxu0 0.0
  %1283 = vmatpush1.xpose.msra.mxu0 0.0
  %1284 = vmatprep.subr.mxu0 0.0
  %1285 = vmatpush1.xpose.msra.mxu0 0.0
  %1286 = vmatprep.subr.mxu0 0.0
  %1287 = vmatpush1.xpose.msra.mxu0 0.0
  %1288 = vmatprep.subr.mxu0 0.0
  %1289 = vmatpush1.xpose.msra.mxu0 0.0
  %1290 = vmatprep.subr.mxu0 0.0
  %1291 = vmatpush1.xpose.msra.mxu0 0.0
  %1292 = vmatprep.subr.mxu0 0.0
  %1293 = vmatpush1.xpose.msra.mxu0 0.0
  %1294 = vmatprep.subr.mxu0 0.0
  %1295 = vmatpush1.xpose.msra.mxu0 0.0
  %1296 = vmatprep.subr.mxu0 0.0
  %1297 = vmatpush1.xpose.msra.mxu0 0.0
  %1298 = vmatprep.mubr.f32.mxu0 0.0
  %1299 = vmatmul.mubr.f32.gmra.mrb[0].mxu0 %v1229
  %v1300 = vpop.f32.mrb[0].mxu0
  %v1301 = vadd.f32 0.0, %v1300
  %v1302 = vpop.f32.mrb[0].mxu0
  %1303 = vdwg.mxu0
  %v1304 = vstv %s1227
  %v1305 = vmul.f32 %v1304, %v1301
  %1307 = vrot.lane.b32.xlu0 %v971, 32
  %v1308 = vpop.permute.xlu0 %1307
  %1310 = vrot.lane.b32.xlu0 %v1209, 64
  %v1311 = vpop.permute.xlu0 %1310
  %1313 = vrot.lane.b32.xlu0 %v1223, 96
  %v1314 = vpop.permute.xlu0 %1313
  %v1316 = vsel %vm993, %v710, %v1308
  %v1317 = vsel %vm381, %v1316, %v1311
  %vm1318 = vcmask 785408
  %v1319 = vsel %vm1318, %v1317, %v1314
  %1320 = vst [vmem:[%s10] sm:$0x3] %v1319
  %vm1321 = vcmask 9216
  %1322 = vst.msk [vmem:[%s11] sm:$0x3] %vm1321, %v1305
  // Predicated region
  $region42: #{slip_forward.1} parent=0 // pred_check
    _
  $region43: #{slip_forward.1} parent=0 // pred_check_branch
    %1324 = sbr.rel (0) target = $region45
  $region44: #{slip_forward.1} parent=0 // pred_region
    _
  $region45: #{slip_forward.1} parent=0 // pred_fallthru
    _
  // Predicated region
  $region46: #{slip_forward.1} parent=0 // pred_check
    _
  $region47: #{slip_forward.1} parent=0 // pred_check_branch
    %1326 = sbr.rel (0) target = $region49
  $region48: #{slip_forward.1} parent=0 // pred_region
    _
  $region49: #{slip_forward.1} parent=0 // pred_fallthru
    _
  // Predicated region
  $region50: #{slip_forward.1} parent=0 // pred_check
    _
  $region51: #{slip_forward.1} parent=0 // pred_check_branch
    %1328 = sbr.rel (0) target = $region53
  $region52: #{slip_forward.1} parent=0 // pred_region
    _
  $region53: #{slip_forward.1} parent=0 // pred_fallthru
    _
  // Predicated region
  $region54: #{slip_forward.1} parent=0 // pred_check
    _
  $region55: #{slip_forward.1} parent=0 // pred_check_branch
    %1330 = sbr.rel (0) target = $region57
  $region56: #{slip_forward.1} parent=0 // pred_region
    _
  $region57: #{slip_forward.1} parent=0 // pred_fallthru
    _

</llo_original>
